<compile_context>
chip_gen: v6e
topology: v6e:2x2x1
jax: 0.10.0
libtpu: 0.0.40
codegen_flags: <defaults>
</compile_context>

<pallas_src>
import functools

import jax
import jax.numpy as jnp
from jax.experimental import pallas as pl
from jax.experimental.pallas import tpu as pltpu


def _attention_layer_kernel(*refs, n_head, n_type, dout, neg_slope, res_mode):
    """Processes one batch element; all heads and edge types fused."""
    if res_mode == "linear":
        (x_ref, adj_ref, aeff_ref, nmask_ref, w_ref,
         wres_ref, bres_ref, o_ref) = refs
    else:
        x_ref, adj_ref, aeff_ref, nmask_ref, w_ref, o_ref = refs

    x = x_ref[0]            # [E, Din]   f32
    adj = adj_ref[0]        # [E, E]     int32 edge-type ids (0 = no edge)
    mask = nmask_ref[0]     # [E, 1]     f32
    x_bf = x.astype(jnp.bfloat16)

    # --- One wide, lane-dense MXU matmul covering every (head, type) projection.
    h_all = jnp.dot(x_bf, w_ref[...],
                    preferred_element_type=jnp.float32)   # [E, n_head*n_type*dout]

    # --- Edge masks hoisted out of the head loop (computed once per batch step).
    edge_mask = adj > 0
    type_masks = [adj == (t + 1) for t in range(n_type)]

    head_outs = []
    for hd in range(n_head):
        scores = jnp.zeros(adj.shape, jnp.float32)
        h_t = None
        for t in range(n_type):
            c0 = (hd * n_type + t) * dout
            h_t = h_all[:, c0:c0 + dout]                  # [E, dout] f32
            a_row = aeff_ref[0, hd, t]                    # [1, 2*dout] gated attn vec
            a_src = a_row[:, :dout]                       # [1, dout]
            a_dst = a_row[:, dout:]                       # [1, dout]
            # score[i, j] = lrelu(h[i]·a_src + h[j]·a_dst)  (rank-1 decomposition of
            # the reference's (E*E, 2d) @ (2d, 1) projection).
            si = jnp.sum(h_t * a_src, axis=-1, keepdims=True)            # [E, 1]
            sj = jax.lax.dot_general(a_dst, h_t, (((1,), (1,)), ((), ())),
                                     preferred_element_type=jnp.float32)  # [1, E]
            s = si + sj                                                   # [E, E]
            score = jnp.where(s > 0, s, neg_slope * s)                    # LeakyReLU
            scores = scores + jnp.where(type_masks[t], score, 0.0)

        # Value matrix = LAST edge type's projection (matches the PyTorch
        # reference, which reuses `h` from the final loop iteration), masked.
        h_val = h_t * mask
        scores = jnp.where(edge_mask, scores, -1e30)
        m = jnp.max(scores, axis=-1, keepdims=True)
        e = jnp.exp(scores - m)
        inv = pl.reciprocal(jnp.sum(e, axis=-1, keepdims=True), approx=True)
        coefs = e * inv                                                  # softmax over j
        # out[j, d] = sum_i coefs[i, j] * h_val[i, d]   (== coefs^T @ h_val)
        head_outs.append(jax.lax.dot_general(
            coefs, h_val, (((0,), (0,)), ((), ())),
            preferred_element_type=jnp.float32))                         # [E, dout]

    # --- Head concat + ReLU + residual; ONE full lane-dense [E, Hid] store.
    hcat = jnp.maximum(jnp.concatenate(head_outs, axis=-1), 0.0)
    if res_mode == "identity":
        hcat = hcat + x
    elif res_mode == "linear":
        res = jnp.dot(x_bf, wres_ref[...],
                      preferred_element_type=jnp.float32) + bres_ref[...]
        hcat = hcat + res
    # TODO(synk): F.dropout (gnn_drop / gnn_attn_drop / layer drop) skipped
    # (eval-mode identity).
    o_ref[0] = hcat.astype(o_ref.dtype)


@functools.partial(jax.jit,
                   static_argnames=("q_attn", "graph_residual", "neg_slope"))
def attention_layer_forward(x, adj, query_vec, node_mask, params,
                            res_params=None, *, q_attn=True,
                            graph_residual=True, neg_slope=0.2):
    """AttentionLayer.forward: multi-head GAT + ReLU + (optional) residual."""
    W, a, qW1, qW2 = params
    N, E, Din = x.shape
    n_head, n_type, _, Dout = W.shape
    Hid = n_head * Dout

    x = x.astype(jnp.float32)
    adj_i = adj.astype(jnp.int32)                 # integer edge-type ids
    if node_mask is None:
        node_mask = jnp.ones((N, E, 1), jnp.float32)
    else:
        node_mask = node_mask.reshape(N, E, 1).astype(jnp.float32)

    # Fused projection weight: [Din, n_head * n_type * Dout], bf16 for the MXU.
    W_all = jnp.transpose(W, (2, 0, 1, 3)).reshape(
        Din, n_head * n_type * Dout).astype(jnp.bfloat16)

    # Effective attention vectors (query gating folded in).  The M=1 relu/sigmoid
    # gate matmuls live here as one tiny XLA op instead of 2*n_head*n_type MXU
    # launches per grid step.
    if q_attn:
        if query_vec is None:
            query_vec = jnp.zeros((N, Din), jnp.float32)
        qv = query_vec.astype(jnp.float32)
        g = jnp.maximum(jnp.einsum("nd,htdf->nhtf", qv, qW1), 0.0)
        g = jax.nn.sigmoid(jnp.einsum("nhtf,htfg->nhtg", g, qW2))
        a_eff = a[None, :, :, 0, :] * g                       # [N, n_head, n_type, 2*Dout]
    else:
        a_eff = jnp.broadcast_to(a[None, :, :, 0, :],
                                 (N, n_head, n_type, 2 * Dout))
    a_eff = a_eff.reshape(N, n_head, n_type, 1, 2 * Dout).astype(jnp.float32)

    # Residual mode (static).
    if graph_residual:
        if res_params is not None:
            w_res, b_res = res_params                         # torch Linear: x @ W^T + b
            wres_t = jnp.transpose(w_res).astype(jnp.bfloat16)   # [Din, Hid]
            bres = b_res.reshape(1, Hid).astype(jnp.float32)
            res_mode = "linear"
        else:
            assert Din == Hid, "identity residual requires in_dim == hid_dim"
            res_mode = "identity"
    else:
        res_mode = "none"

    in_specs = [
        pl.BlockSpec((1, E, Din), lambda b: (b, 0, 0)),          # node states (f32)
        pl.BlockSpec((1, E, E), lambda b: (b, 0, 0)),            # adjacency (int32)
        pl.BlockSpec((1, n_head, n_type, 1, 2 * Dout),
                     lambda b: (b, 0, 0, 0, 0)),                 # gated attn vectors
        pl.BlockSpec((1, E, 1), lambda b: (b, 0, 0)),            # node mask
        # weights: constant index maps -> fetched once, VMEM-resident
        pl.BlockSpec((Din, n_head * n_type * Dout), lambda b: (0, 0)),   # W_all
    ]
    inputs = [x, adj_i, a_eff, node_mask, W_all]
    if res_mode == "linear":
        in_specs += [pl.BlockSpec((Din, Hid), lambda b: (0, 0)),
                     pl.BlockSpec((1, Hid), lambda b: (0, 0))]
        inputs += [wres_t, bres]

    kernel = functools.partial(
        _attention_layer_kernel, n_head=n_head, n_type=n_type, dout=Dout,
        neg_slope=neg_slope, res_mode=res_mode)

    return pl.pallas_call(
        kernel,
        out_shape=jax.ShapeDtypeStruct((N, E, Hid), jnp.float32),
        grid_spec=pltpu.PrefetchScalarGridSpec(
            num_scalar_prefetch=0,
            grid=(N,),
            in_specs=in_specs,
            out_specs=pl.BlockSpec((1, E, Hid), lambda b: (b, 0, 0)),
        ),
        compiler_params=pltpu.CompilerParams(
            dimension_semantics=("parallel",)),
    )(*inputs)


def _attention_layer_ref(x, adj, query_vec, node_mask, params, res_params=None,
                         *, q_attn=True, graph_residual=True, neg_slope=0.2):
    """Pure-JAX (f32) reference mirroring the PyTorch forward (eval mode)."""
    W, a, qW1, qW2 = params
    N, E, Din = x.shape
    n_head, n_type, _, Dout = W.shape
    nmask = (jnp.ones((N, E, 1), jnp.float32) if node_mask is None
             else node_mask.reshape(N, E, 1).astype(jnp.float32))
    heads = []
    for hd in range(n_head):
        scores = jnp.zeros((N, E, E), jnp.float32)
        h = None
        for t in range(n_type):
            h = jnp.einsum("ned,df->nef", x, W[hd, t])
            a_row = a[hd, t]                                  # [1, 2*Dout]
            if q_attn:
                g = jnp.maximum(query_vec @ qW1[hd, t], 0.0)  # [N, 2*Dout]
                g = g @ qW2[hd, t]
                g = 1.0 / (1.0 + jnp.exp(-g))
                a_eff = a_row * g
            else:
                a_eff = jnp.broadcast_to(a_row, (N, 2 * Dout))
            a_src, a_dst = a_eff[:, :Dout], a_eff[:, Dout:]
            si = jnp.einsum("nef,nf->ne", h, a_src)
            sj = jnp.einsum("nef,nf->ne", h, a_dst)
            s = si[:, :, None] + sj[:, None, :]
            score = jnp.where(s > 0, s, neg_slope * s)
            scores = scores + jnp.where(adj == (t + 1), score, 0.0)
        h_val = h * nmask
        scores = jnp.where(adj > 0, scores, -1e30)
        m = jnp.max(scores, axis=-1, keepdims=True)
        e = jnp.exp(scores - m)
        coefs = e / jnp.sum(e, axis=-1, keepdims=True)
        heads.append(jnp.einsum("nij,nid->njd", coefs, h_val))
    hcat = jnp.maximum(jnp.concatenate(heads, axis=-1), 0.0)
    if graph_residual:
        if res_params is not None:
            w_res, b_res = res_params
            hcat = hcat + jnp.einsum("ned,hd->neh", x, w_res) + b_res
        else:
            hcat = hcat + x
    return hcat


if __name__ == "__main__":
    key = jax.random.PRNGKey(0)
    N, E, in_dim, hid_dim, n_head, n_type = 2, 16, 32, 32, 2, 3
    Dout = hid_dim // n_head

    ks = jax.random.split(key, 8)
    x = jax.random.normal(ks[0], (N, E, in_dim), jnp.float32)
    adj = jax.random.randint(ks[1], (N, E, E), 0, n_type + 1).astype(jnp.float32)
    query_vec = jax.random.normal(ks[2], (N, in_dim), jnp.float32)
    node_mask = (jax.random.uniform(ks[3], (N, E, 1)) > 0.2).astype(jnp.float32)

    scale = 0.1
    params = (
        scale * jax.random.normal(ks[4], (n_head, n_type, in_dim, Dout),
                                  jnp.float32),                    # W_type
        scale * jax.random.normal(ks[5], (n_head, n_type, 1, 2 * Dout),
                                  jnp.float32),                    # a_type (row)
        scale * jax.random.normal(ks[6], (n_head, n_type, in_dim, 2 * Dout),
                                  jnp.float32),                    # qattn_W1
        scale * jax.random.normal(ks[7], (n_head, n_type, 2 * Dout, 2 * Dout),
                                  jnp.float32),                    # qattn_W2
    )

    out = attention_layer_forward(x, adj, query_vec, node_mask, params,
                                  q_attn=True, graph_residual=True)
    out = jax.block_until_ready(out)

    ref = _attention_layer_ref(x, adj, query_vec, node_mask, params,
                               q_attn=True, graph_residual=True)
    assert out.shape == (N, E, hid_dim), out.shape
    assert bool(jnp.all(jnp.isfinite(out)))
    max_err = float(jnp.max(jnp.abs(out - ref)))
    # Tolerance accounts for bf16 MXU operands (f32 accumulate) in the kernel.
    assert max_err < 3e-2, f"max abs err vs reference: {max_err}"
    print("KERNEL_OK")
</pallas_src>

<mosaic_0001>
module attributes {stable_mosaic.version = 11 : i64} {
  func.func @_attention_layer_kernel(%arg0: i32, %arg1: memref<1x16x32xf32, #tpu.memory_space<vmem>>, %arg2: memref<1x16x16xi32, #tpu.memory_space<vmem>>, %arg3: memref<1x2x3x1x32xf32, #tpu.memory_space<vmem>>, %arg4: memref<1x16x1xf32, #tpu.memory_space<vmem>>, %arg5: memref<32x96xbf16, #tpu.memory_space<vmem>>, %arg6: memref<1x16x32xf32, #tpu.memory_space<vmem>>) attributes {dimension_semantics = [#tpu.dimension_semantics<parallel>], iteration_bounds = array<i64: 2>, scalar_prefetch = 0 : i64, scratch_operands = 0 : i64, tpu.core_type = #tpu.core_type<tc>, window_params = [{transform_indices = @transform_0, window_bounds = array<i64: 1, 16, 32>}, {transform_indices = @transform_1, window_bounds = array<i64: 1, 16, 16>}, {transform_indices = @transform_2, window_bounds = array<i64: 1, 2, 3, 1, 32>}, {transform_indices = @transform_3, window_bounds = array<i64: 1, 16, 1>}, {pipeline_mode = #tpu.pipeline_mode<synchronous>, transform_indices = @transform_4, window_bounds = array<i64: 32, 96>}, {transform_indices = @transform_5, window_bounds = array<i64: 1, 16, 32>}]} {
    %c0 = arith.constant 0 : index
    %c0_0 = arith.constant 0 : index
    %c0_1 = arith.constant 0 : index
    %0 = vector.load %arg1[%c0, %c0_0, %c0_1] : memref<1x16x32xf32, #tpu.memory_space<vmem>>, vector<1x16x32xf32>
    %1 = vector.shape_cast %0 : vector<1x16x32xf32> to vector<16x32xf32>
    %c0_2 = arith.constant 0 : index
    %c0_3 = arith.constant 0 : index
    %c0_4 = arith.constant 0 : index
    %2 = vector.load %arg2[%c0_2, %c0_3, %c0_4] : memref<1x16x16xi32, #tpu.memory_space<vmem>>, vector<1x16x16xi32>
    %3 = vector.shape_cast %2 : vector<1x16x16xi32> to vector<16x16xi32>
    %c0_5 = arith.constant 0 : index
    %c0_6 = arith.constant 0 : index
    %c0_7 = arith.constant 0 : index
    %4 = vector.load %arg4[%c0_5, %c0_6, %c0_7] : memref<1x16x1xf32, #tpu.memory_space<vmem>>, vector<1x16x1xf32>
    %5 = vector.shape_cast %4 : vector<1x16x1xf32> to vector<16x1xf32>
    %6 = arith.truncf %1 : vector<16x32xf32> to vector<16x32xbf16>
    %c0_8 = arith.constant 0 : index
    %c0_9 = arith.constant 0 : index
    %7 = vector.load %arg5[%c0_8, %c0_9] : memref<32x96xbf16, #tpu.memory_space<vmem>>, vector<32x96xbf16>
    %cst = arith.constant dense<0.000000e+00> : vector<16x96xf32>
    %8 = tpu.matmul %6, %7, %cst {dimension_numbers = #tpu.dot_dimension_numbers<[1], [0], [0], [1], [0, 0, 1, 1], [], []>} : vector<16x32xbf16>, vector<32x96xbf16>, vector<16x96xf32> -> vector<16x96xf32>
    %c0_i32 = arith.constant 0 : i32
    %9 = vector.broadcast %c0_i32 : i32 to vector<16x16xi32>
    %10 = arith.cmpi sgt, %3, %9 : vector<16x16xi32>
    %c1_i32 = arith.constant 1 : i32
    %11 = vector.broadcast %c1_i32 : i32 to vector<16x16xi32>
    %12 = arith.cmpi eq, %3, %11 : vector<16x16xi32>
    %c2_i32 = arith.constant 2 : i32
    %13 = vector.broadcast %c2_i32 : i32 to vector<16x16xi32>
    %14 = arith.cmpi eq, %3, %13 : vector<16x16xi32>
    %c3_i32 = arith.constant 3 : i32
    %15 = vector.broadcast %c3_i32 : i32 to vector<16x16xi32>
    %16 = arith.cmpi eq, %3, %15 : vector<16x16xi32>
    %cst_10 = arith.constant 0.000000e+00 : f32
    %17 = vector.broadcast %cst_10 : f32 to vector<16x16xf32>
    %18 = vector.extract_strided_slice %8 {offsets = [0, 0], sizes = [16, 16], strides = [1, 1]} : vector<16x96xf32> to vector<16x16xf32>
    %c0_11 = arith.constant 0 : index
    %c0_12 = arith.constant 0 : index
    %c0_13 = arith.constant 0 : index
    %c0_14 = arith.constant 0 : index
    %c0_15 = arith.constant 0 : index
    %19 = vector.load %arg3[%c0_11, %c0_12, %c0_13, %c0_14, %c0_15] : memref<1x2x3x1x32xf32, #tpu.memory_space<vmem>>, vector<1x1x1x1x32xf32>
    %20 = vector.shape_cast %19 : vector<1x1x1x1x32xf32> to vector<1x32xf32>
    %21 = vector.extract_strided_slice %20 {offsets = [0, 0], sizes = [1, 16], strides = [1, 1]} : vector<1x32xf32> to vector<1x16xf32>
    %22 = vector.extract_strided_slice %20 {offsets = [0, 16], sizes = [1, 16], strides = [1, 1]} : vector<1x32xf32> to vector<1x16xf32>
    %23 = vector.broadcast %21 : vector<1x16xf32> to vector<16x16xf32>
    %24 = arith.mulf %18, %23 : vector<16x16xf32>
    %cst_16 = arith.constant dense<0.000000e+00> : vector<16xf32>
    %25 = vector.multi_reduction <add>, %24, %cst_16 [1] : vector<16x16xf32> to vector<16xf32>
    %26 = vector.shape_cast %25 : vector<16xf32> to vector<16x1xf32>
    %cst_17 = arith.constant dense<0.000000e+00> : vector<1x16xf32>
    %27 = tpu.matmul %22, %18, %cst_17 {dimension_numbers = #tpu.dot_dimension_numbers<[1], [1], [0], [0], [0, 0, 1, 0], [], []>} : vector<1x16xf32>, vector<16x16xf32>, vector<1x16xf32> -> vector<1x16xf32>
    %28 = vector.broadcast %26 : vector<16x1xf32> to vector<16x16xf32>
    %29 = vector.broadcast %27 : vector<1x16xf32> to vector<16x16xf32>
    %30 = arith.addf %28, %29 : vector<16x16xf32>
    %cst_18 = arith.constant 0.000000e+00 : f32
    %31 = vector.broadcast %cst_18 : f32 to vector<16x16xf32>
    %32 = arith.cmpf ogt, %30, %31 : vector<16x16xf32>
    %cst_19 = arith.constant 2.000000e-01 : f32
    %33 = vector.broadcast %cst_19 : f32 to vector<16x16xf32>
    %34 = arith.mulf %33, %30 : vector<16x16xf32>
    %35 = arith.select %32, %30, %34 : vector<16x16xi1>, vector<16x16xf32>
    %cst_20 = arith.constant 0.000000e+00 : f32
    %36 = vector.broadcast %cst_20 : f32 to vector<16x16xf32>
    %37 = arith.select %12, %35, %36 : vector<16x16xi1>, vector<16x16xf32>
    %38 = arith.addf %17, %37 : vector<16x16xf32>
    %39 = vector.extract_strided_slice %8 {offsets = [0, 16], sizes = [16, 16], strides = [1, 1]} : vector<16x96xf32> to vector<16x16xf32>
    %c0_21 = arith.constant 0 : index
    %c0_22 = arith.constant 0 : index
    %c1 = arith.constant 1 : index
    %c0_23 = arith.constant 0 : index
    %c0_24 = arith.constant 0 : index
    %40 = vector.load %arg3[%c0_21, %c0_22, %c1, %c0_23, %c0_24] : memref<1x2x3x1x32xf32, #tpu.memory_space<vmem>>, vector<1x1x1x1x32xf32>
    %41 = vector.shape_cast %40 : vector<1x1x1x1x32xf32> to vector<1x32xf32>
    %42 = vector.extract_strided_slice %41 {offsets = [0, 0], sizes = [1, 16], strides = [1, 1]} : vector<1x32xf32> to vector<1x16xf32>
    %43 = vector.extract_strided_slice %41 {offsets = [0, 16], sizes = [1, 16], strides = [1, 1]} : vector<1x32xf32> to vector<1x16xf32>
    %44 = vector.broadcast %42 : vector<1x16xf32> to vector<16x16xf32>
    %45 = arith.mulf %39, %44 : vector<16x16xf32>
    %cst_25 = arith.constant dense<0.000000e+00> : vector<16xf32>
    %46 = vector.multi_reduction <add>, %45, %cst_25 [1] : vector<16x16xf32> to vector<16xf32>
    %47 = vector.shape_cast %46 : vector<16xf32> to vector<16x1xf32>
    %cst_26 = arith.constant dense<0.000000e+00> : vector<1x16xf32>
    %48 = tpu.matmul %43, %39, %cst_26 {dimension_numbers = #tpu.dot_dimension_numbers<[1], [1], [0], [0], [0, 0, 1, 0], [], []>} : vector<1x16xf32>, vector<16x16xf32>, vector<1x16xf32> -> vector<1x16xf32>
    %49 = vector.broadcast %47 : vector<16x1xf32> to vector<16x16xf32>
    %50 = vector.broadcast %48 : vector<1x16xf32> to vector<16x16xf32>
    %51 = arith.addf %49, %50 : vector<16x16xf32>
    %cst_27 = arith.constant 0.000000e+00 : f32
    %52 = vector.broadcast %cst_27 : f32 to vector<16x16xf32>
    %53 = arith.cmpf ogt, %51, %52 : vector<16x16xf32>
    %cst_28 = arith.constant 2.000000e-01 : f32
    %54 = vector.broadcast %cst_28 : f32 to vector<16x16xf32>
    %55 = arith.mulf %54, %51 : vector<16x16xf32>
    %56 = arith.select %53, %51, %55 : vector<16x16xi1>, vector<16x16xf32>
    %cst_29 = arith.constant 0.000000e+00 : f32
    %57 = vector.broadcast %cst_29 : f32 to vector<16x16xf32>
    %58 = arith.select %14, %56, %57 : vector<16x16xi1>, vector<16x16xf32>
    %59 = arith.addf %38, %58 : vector<16x16xf32>
    %60 = vector.extract_strided_slice %8 {offsets = [0, 32], sizes = [16, 16], strides = [1, 1]} : vector<16x96xf32> to vector<16x16xf32>
    %c0_30 = arith.constant 0 : index
    %c0_31 = arith.constant 0 : index
    %c2 = arith.constant 2 : index
    %c0_32 = arith.constant 0 : index
    %c0_33 = arith.constant 0 : index
    %61 = vector.load %arg3[%c0_30, %c0_31, %c2, %c0_32, %c0_33] : memref<1x2x3x1x32xf32, #tpu.memory_space<vmem>>, vector<1x1x1x1x32xf32>
    %62 = vector.shape_cast %61 : vector<1x1x1x1x32xf32> to vector<1x32xf32>
    %63 = vector.extract_strided_slice %62 {offsets = [0, 0], sizes = [1, 16], strides = [1, 1]} : vector<1x32xf32> to vector<1x16xf32>
    %64 = vector.extract_strided_slice %62 {offsets = [0, 16], sizes = [1, 16], strides = [1, 1]} : vector<1x32xf32> to vector<1x16xf32>
    %65 = vector.broadcast %63 : vector<1x16xf32> to vector<16x16xf32>
    %66 = arith.mulf %60, %65 : vector<16x16xf32>
    %cst_34 = arith.constant dense<0.000000e+00> : vector<16xf32>
    %67 = vector.multi_reduction <add>, %66, %cst_34 [1] : vector<16x16xf32> to vector<16xf32>
    %68 = vector.shape_cast %67 : vector<16xf32> to vector<16x1xf32>
    %cst_35 = arith.constant dense<0.000000e+00> : vector<1x16xf32>
    %69 = tpu.matmul %64, %60, %cst_35 {dimension_numbers = #tpu.dot_dimension_numbers<[1], [1], [0], [0], [0, 0, 1, 0], [], []>} : vector<1x16xf32>, vector<16x16xf32>, vector<1x16xf32> -> vector<1x16xf32>
    %70 = vector.broadcast %68 : vector<16x1xf32> to vector<16x16xf32>
    %71 = vector.broadcast %69 : vector<1x16xf32> to vector<16x16xf32>
    %72 = arith.addf %70, %71 : vector<16x16xf32>
    %cst_36 = arith.constant 0.000000e+00 : f32
    %73 = vector.broadcast %cst_36 : f32 to vector<16x16xf32>
    %74 = arith.cmpf ogt, %72, %73 : vector<16x16xf32>
    %cst_37 = arith.constant 2.000000e-01 : f32
    %75 = vector.broadcast %cst_37 : f32 to vector<16x16xf32>
    %76 = arith.mulf %75, %72 : vector<16x16xf32>
    %77 = arith.select %74, %72, %76 : vector<16x16xi1>, vector<16x16xf32>
    %cst_38 = arith.constant 0.000000e+00 : f32
    %78 = vector.broadcast %cst_38 : f32 to vector<16x16xf32>
    %79 = arith.select %16, %77, %78 : vector<16x16xi1>, vector<16x16xf32>
    %80 = arith.addf %59, %79 : vector<16x16xf32>
    %81 = vector.broadcast %5 : vector<16x1xf32> to vector<16x16xf32>
    %82 = arith.mulf %60, %81 : vector<16x16xf32>
    %cst_39 = arith.constant -1.000000e+30 : f32
    %83 = vector.broadcast %cst_39 : f32 to vector<16x16xf32>
    %84 = arith.select %10, %80, %83 : vector<16x16xi1>, vector<16x16xf32>
    %cst_40 = arith.constant dense<0xFF800000> : vector<16xf32>
    %85 = vector.multi_reduction <maximumf>, %84, %cst_40 [1] : vector<16x16xf32> to vector<16xf32>
    %86 = vector.shape_cast %85 : vector<16xf32> to vector<16x1xf32>
    %87 = vector.broadcast %86 : vector<16x1xf32> to vector<16x16xf32>
    %88 = arith.subf %84, %87 : vector<16x16xf32>
    %89 = math.exp %88 : vector<16x16xf32>
    %cst_41 = arith.constant dense<0.000000e+00> : vector<16xf32>
    %90 = vector.multi_reduction <add>, %89, %cst_41 [1] : vector<16x16xf32> to vector<16xf32>
    %91 = vector.shape_cast %90 : vector<16xf32> to vector<16x1xf32>
    %92 = tpu.reciprocal %91 {approx = true} : vector<16x1xf32> -> vector<16x1xf32>
    %93 = vector.broadcast %92 : vector<16x1xf32> to vector<16x16xf32>
    %94 = arith.mulf %89, %93 : vector<16x16xf32>
    %cst_42 = arith.constant dense<0.000000e+00> : vector<16x16xf32>
    %95 = tpu.matmul %94, %82, %cst_42 {dimension_numbers = #tpu.dot_dimension_numbers<[0], [0], [1], [1], [0, 1, 1, 1], [], []>} : vector<16x16xf32>, vector<16x16xf32>, vector<16x16xf32> -> vector<16x16xf32>
    %cst_43 = arith.constant 0.000000e+00 : f32
    %96 = vector.broadcast %cst_43 : f32 to vector<16x16xf32>
    %97 = vector.extract_strided_slice %8 {offsets = [0, 48], sizes = [16, 16], strides = [1, 1]} : vector<16x96xf32> to vector<16x16xf32>
    %c0_44 = arith.constant 0 : index
    %c1_45 = arith.constant 1 : index
    %c0_46 = arith.constant 0 : index
    %c0_47 = arith.constant 0 : index
    %c0_48 = arith.constant 0 : index
    %98 = vector.load %arg3[%c0_44, %c1_45, %c0_46, %c0_47, %c0_48] : memref<1x2x3x1x32xf32, #tpu.memory_space<vmem>>, vector<1x1x1x1x32xf32>
    %99 = vector.shape_cast %98 : vector<1x1x1x1x32xf32> to vector<1x32xf32>
    %100 = vector.extract_strided_slice %99 {offsets = [0, 0], sizes = [1, 16], strides = [1, 1]} : vector<1x32xf32> to vector<1x16xf32>
    %101 = vector.extract_strided_slice %99 {offsets = [0, 16], sizes = [1, 16], strides = [1, 1]} : vector<1x32xf32> to vector<1x16xf32>
    %102 = vector.broadcast %100 : vector<1x16xf32> to vector<16x16xf32>
    %103 = arith.mulf %97, %102 : vector<16x16xf32>
    %cst_49 = arith.constant dense<0.000000e+00> : vector<16xf32>
    %104 = vector.multi_reduction <add>, %103, %cst_49 [1] : vector<16x16xf32> to vector<16xf32>
    %105 = vector.shape_cast %104 : vector<16xf32> to vector<16x1xf32>
    %cst_50 = arith.constant dense<0.000000e+00> : vector<1x16xf32>
    %106 = tpu.matmul %101, %97, %cst_50 {dimension_numbers = #tpu.dot_dimension_numbers<[1], [1], [0], [0], [0, 0, 1, 0], [], []>} : vector<1x16xf32>, vector<16x16xf32>, vector<1x16xf32> -> vector<1x16xf32>
    %107 = vector.broadcast %105 : vector<16x1xf32> to vector<16x16xf32>
    %108 = vector.broadcast %106 : vector<1x16xf32> to vector<16x16xf32>
    %109 = arith.addf %107, %108 : vector<16x16xf32>
    %cst_51 = arith.constant 0.000000e+00 : f32
    %110 = vector.broadcast %cst_51 : f32 to vector<16x16xf32>
    %111 = arith.cmpf ogt, %109, %110 : vector<16x16xf32>
    %cst_52 = arith.constant 2.000000e-01 : f32
    %112 = vector.broadcast %cst_52 : f32 to vector<16x16xf32>
    %113 = arith.mulf %112, %109 : vector<16x16xf32>
    %114 = arith.select %111, %109, %113 : vector<16x16xi1>, vector<16x16xf32>
    %cst_53 = arith.constant 0.000000e+00 : f32
    %115 = vector.broadcast %cst_53 : f32 to vector<16x16xf32>
    %116 = arith.select %12, %114, %115 : vector<16x16xi1>, vector<16x16xf32>
    %117 = arith.addf %96, %116 : vector<16x16xf32>
    %118 = vector.extract_strided_slice %8 {offsets = [0, 64], sizes = [16, 16], strides = [1, 1]} : vector<16x96xf32> to vector<16x16xf32>
    %c0_54 = arith.constant 0 : index
    %c1_55 = arith.constant 1 : index
    %c1_56 = arith.constant 1 : index
    %c0_57 = arith.constant 0 : index
    %c0_58 = arith.constant 0 : index
    %119 = vector.load %arg3[%c0_54, %c1_55, %c1_56, %c0_57, %c0_58] : memref<1x2x3x1x32xf32, #tpu.memory_space<vmem>>, vector<1x1x1x1x32xf32>
    %120 = vector.shape_cast %119 : vector<1x1x1x1x32xf32> to vector<1x32xf32>
    %121 = vector.extract_strided_slice %120 {offsets = [0, 0], sizes = [1, 16], strides = [1, 1]} : vector<1x32xf32> to vector<1x16xf32>
    %122 = vector.extract_strided_slice %120 {offsets = [0, 16], sizes = [1, 16], strides = [1, 1]} : vector<1x32xf32> to vector<1x16xf32>
    %123 = vector.broadcast %121 : vector<1x16xf32> to vector<16x16xf32>
    %124 = arith.mulf %118, %123 : vector<16x16xf32>
    %cst_59 = arith.constant dense<0.000000e+00> : vector<16xf32>
    %125 = vector.multi_reduction <add>, %124, %cst_59 [1] : vector<16x16xf32> to vector<16xf32>
    %126 = vector.shape_cast %125 : vector<16xf32> to vector<16x1xf32>
    %cst_60 = arith.constant dense<0.000000e+00> : vector<1x16xf32>
    %127 = tpu.matmul %122, %118, %cst_60 {dimension_numbers = #tpu.dot_dimension_numbers<[1], [1], [0], [0], [0, 0, 1, 0], [], []>} : vector<1x16xf32>, vector<16x16xf32>, vector<1x16xf32> -> vector<1x16xf32>
    %128 = vector.broadcast %126 : vector<16x1xf32> to vector<16x16xf32>
    %129 = vector.broadcast %127 : vector<1x16xf32> to vector<16x16xf32>
    %130 = arith.addf %128, %129 : vector<16x16xf32>
    %cst_61 = arith.constant 0.000000e+00 : f32
    %131 = vector.broadcast %cst_61 : f32 to vector<16x16xf32>
    %132 = arith.cmpf ogt, %130, %131 : vector<16x16xf32>
    %cst_62 = arith.constant 2.000000e-01 : f32
    %133 = vector.broadcast %cst_62 : f32 to vector<16x16xf32>
    %134 = arith.mulf %133, %130 : vector<16x16xf32>
    %135 = arith.select %132, %130, %134 : vector<16x16xi1>, vector<16x16xf32>
    %cst_63 = arith.constant 0.000000e+00 : f32
    %136 = vector.broadcast %cst_63 : f32 to vector<16x16xf32>
    %137 = arith.select %14, %135, %136 : vector<16x16xi1>, vector<16x16xf32>
    %138 = arith.addf %117, %137 : vector<16x16xf32>
    %139 = vector.extract_strided_slice %8 {offsets = [0, 80], sizes = [16, 16], strides = [1, 1]} : vector<16x96xf32> to vector<16x16xf32>
    %c0_64 = arith.constant 0 : index
    %c1_65 = arith.constant 1 : index
    %c2_66 = arith.constant 2 : index
    %c0_67 = arith.constant 0 : index
    %c0_68 = arith.constant 0 : index
    %140 = vector.load %arg3[%c0_64, %c1_65, %c2_66, %c0_67, %c0_68] : memref<1x2x3x1x32xf32, #tpu.memory_space<vmem>>, vector<1x1x1x1x32xf32>
    %141 = vector.shape_cast %140 : vector<1x1x1x1x32xf32> to vector<1x32xf32>
    %142 = vector.extract_strided_slice %141 {offsets = [0, 0], sizes = [1, 16], strides = [1, 1]} : vector<1x32xf32> to vector<1x16xf32>
    %143 = vector.extract_strided_slice %141 {offsets = [0, 16], sizes = [1, 16], strides = [1, 1]} : vector<1x32xf32> to vector<1x16xf32>
    %144 = vector.broadcast %142 : vector<1x16xf32> to vector<16x16xf32>
    %145 = arith.mulf %139, %144 : vector<16x16xf32>
    %cst_69 = arith.constant dense<0.000000e+00> : vector<16xf32>
    %146 = vector.multi_reduction <add>, %145, %cst_69 [1] : vector<16x16xf32> to vector<16xf32>
    %147 = vector.shape_cast %146 : vector<16xf32> to vector<16x1xf32>
    %cst_70 = arith.constant dense<0.000000e+00> : vector<1x16xf32>
    %148 = tpu.matmul %143, %139, %cst_70 {dimension_numbers = #tpu.dot_dimension_numbers<[1], [1], [0], [0], [0, 0, 1, 0], [], []>} : vector<1x16xf32>, vector<16x16xf32>, vector<1x16xf32> -> vector<1x16xf32>
    %149 = vector.broadcast %147 : vector<16x1xf32> to vector<16x16xf32>
    %150 = vector.broadcast %148 : vector<1x16xf32> to vector<16x16xf32>
    %151 = arith.addf %149, %150 : vector<16x16xf32>
    %cst_71 = arith.constant 0.000000e+00 : f32
    %152 = vector.broadcast %cst_71 : f32 to vector<16x16xf32>
    %153 = arith.cmpf ogt, %151, %152 : vector<16x16xf32>
    %cst_72 = arith.constant 2.000000e-01 : f32
    %154 = vector.broadcast %cst_72 : f32 to vector<16x16xf32>
    %155 = arith.mulf %154, %151 : vector<16x16xf32>
    %156 = arith.select %153, %151, %155 : vector<16x16xi1>, vector<16x16xf32>
    %cst_73 = arith.constant 0.000000e+00 : f32
    %157 = vector.broadcast %cst_73 : f32 to vector<16x16xf32>
    %158 = arith.select %16, %156, %157 : vector<16x16xi1>, vector<16x16xf32>
    %159 = arith.addf %138, %158 : vector<16x16xf32>
    %160 = vector.broadcast %5 : vector<16x1xf32> to vector<16x16xf32>
    %161 = arith.mulf %139, %160 : vector<16x16xf32>
    %cst_74 = arith.constant -1.000000e+30 : f32
    %162 = vector.broadcast %cst_74 : f32 to vector<16x16xf32>
    %163 = arith.select %10, %159, %162 : vector<16x16xi1>, vector<16x16xf32>
    %cst_75 = arith.constant dense<0xFF800000> : vector<16xf32>
    %164 = vector.multi_reduction <maximumf>, %163, %cst_75 [1] : vector<16x16xf32> to vector<16xf32>
    %165 = vector.shape_cast %164 : vector<16xf32> to vector<16x1xf32>
    %166 = vector.broadcast %165 : vector<16x1xf32> to vector<16x16xf32>
    %167 = arith.subf %163, %166 : vector<16x16xf32>
    %168 = math.exp %167 : vector<16x16xf32>
    %cst_76 = arith.constant dense<0.000000e+00> : vector<16xf32>
    %169 = vector.multi_reduction <add>, %168, %cst_76 [1] : vector<16x16xf32> to vector<16xf32>
    %170 = vector.shape_cast %169 : vector<16xf32> to vector<16x1xf32>
    %171 = tpu.reciprocal %170 {approx = true} : vector<16x1xf32> -> vector<16x1xf32>
    %172 = vector.broadcast %171 : vector<16x1xf32> to vector<16x16xf32>
    %173 = arith.mulf %168, %172 : vector<16x16xf32>
    %cst_77 = arith.constant dense<0.000000e+00> : vector<16x16xf32>
    %174 = tpu.matmul %173, %161, %cst_77 {dimension_numbers = #tpu.dot_dimension_numbers<[0], [0], [1], [1], [0, 1, 1, 1], [], []>} : vector<16x16xf32>, vector<16x16xf32>, vector<16x16xf32> -> vector<16x16xf32>
    %175 = tpu.concatenate %95, %174 in 1 : vector<16x16xf32>, vector<16x16xf32> -> vector<16x32xf32>
    %cst_78 = arith.constant 0.000000e+00 : f32
    %176 = vector.broadcast %cst_78 : f32 to vector<16x32xf32>
    %177 = arith.maximumf %175, %176 : vector<16x32xf32>
    %178 = arith.addf %177, %1 : vector<16x32xf32>
    %c0_79 = arith.constant 0 : index
    %c0_80 = arith.constant 0 : index
    %c0_81 = arith.constant 0 : index
    %179 = vector.load %arg6[%c0_79, %c0_80, %c0_81] : memref<1x16x32xf32, #tpu.memory_space<vmem>>, vector<1x16x32xf32>
    %180 = vector.shape_cast %179 : vector<1x16x32xf32> to vector<16x32xf32>
    %181 = vector.shape_cast %178 : vector<16x32xf32> to vector<1x16x32xf32>
    tpu.vector_store %arg6[%c0_79, %c0_80, %c0_81], %181 {strides = array<i32>} : memref<1x16x32xf32, #tpu.memory_space<vmem>>, vector<1x16x32xf32>,
    return
  }
  func.func @transform_0(%arg0: i32) -> (i32, i32, i32) {
    %c0_i32 = arith.constant 0 : i32
    %c0_i32_0 = arith.constant 0 : i32
    %c0_i32_1 = arith.constant 0 : i32
    return %arg0, %c0_i32, %c0_i32_0 : i32, i32, i32
  }
  func.func @transform_1(%arg0: i32) -> (i32, i32, i32) {
    %c0_i32 = arith.constant 0 : i32
    %c0_i32_0 = arith.constant 0 : i32
    %c0_i32_1 = arith.constant 0 : i32
    return %arg0, %c0_i32, %c0_i32_0 : i32, i32, i32
  }
  func.func @transform_2(%arg0: i32) -> (i32, i32, i32, i32, i32) {
    %c0_i32 = arith.constant 0 : i32
    %c0_i32_0 = arith.constant 0 : i32
    %c0_i32_1 = arith.constant 0 : i32
    %c0_i32_2 = arith.constant 0 : i32
    %c0_i32_3 = arith.constant 0 : i32
    return %arg0, %c0_i32, %c0_i32_0, %c0_i32_1, %c0_i32_2 : i32, i32, i32, i32, i32
  }
  func.func @transform_3(%arg0: i32) -> (i32, i32, i32) {
    %c0_i32 = arith.constant 0 : i32
    %c0_i32_0 = arith.constant 0 : i32
    %c0_i32_1 = arith.constant 0 : i32
    return %arg0, %c0_i32, %c0_i32_0 : i32, i32, i32
  }
  func.func @transform_4(%arg0: i32) -> (i32, i32) {
    %c0_i32 = arith.constant 0 : i32
    %c0_i32_0 = arith.constant 0 : i32
    %c0_i32_1 = arith.constant 0 : i32
    return %c0_i32, %c0_i32_0 : i32, i32
  }
  func.func @transform_5(%arg0: i32) -> (i32, i32, i32) {
    %c0_i32 = arith.constant 0 : i32
    %c0_i32_0 = arith.constant 0 : i32
    %c0_i32_1 = arith.constant 0 : i32
    return %arg0, %c0_i32, %c0_i32_0 : i32, i32, i32
  }
}

</mosaic_0001>

<llo_original>
// kernel: attention_layer_forward.1
$region0: #{attention_layer_forward.1}
  #allocation0 [shape = 'u32[]', space=smem, size = 0x4, offset = 0x4, fixed_abs, tag = 'smem constant byte address 0x4 - core index']
  #allocation1 [shape = 'u32[144,128]{1,0:T(1,128)}', space=vmem, size = 0x12000, scoped, tag = 'internal scratch']
  %s0 = inlined_call_operand.vmem [shape: f32[2,16,32], index: 0, kind: input, shape index: {}]
  %s1 = inlined_call_operand.vmem [shape: s32[2,16,16], index: 1, kind: input, shape index: {}]
  %s2 = inlined_call_operand.vmem [shape: f32[2,2,3,1,32], index: 2, kind: input, shape index: {}]
  %s3 = inlined_call_operand.vmem [shape: f32[2,16,1], index: 3, kind: input, shape index: {}]
  %s4 = inlined_call_operand.vmem [shape: bf16[32,96], index: 4, kind: input, shape index: {}]
  %s5 = inlined_call_operand.hbm [shape: f32[2,16,32], index: 5, kind: output, shape index: {}]
  %s6 = sld [smem:[#allocation0]]
  $region53: #{attention_layer_forward.1} parent=0
    _
  %s8 = ssub.s32 1, %s6
  %s9 = scalar_select 0, %s8, %s6
  $region1: #{attention_layer_forward.1} parent=0
    #allocation2 [shape = 'u8[16384]{0}', space=vmem, size = 0x4000, scoped, tag = 'output window, operand 0']
    #allocation3 [shape = 's32[2]{0}', space=sflag, size = 0x8, scoped, tag = 'scoped memory for attention_layer_forward.1']
    %10 = vsyncpa [#allocation3], 0
    %s11 = scalar_lea.sflag [#allocation3], 1
    %12 = vsyncpa %s11, 0
    loop: start=0, step=1, limit=4
    $region2: #{attention_layer_forward.1} parent=1 // loop_pre_header
      _
    $region3: #{attention_layer_forward.1} parent=1 // loop_header
      %s14 = sphi 0, %s18
      %p15 = scmp.ge.s32.totalorder %s14, 4
      %s24 = sphi 0, %s26
      %s27 = sphi 0, %s24
      %s28 = sphi 0, %s27
      %s44 = sphi 0, %s28
      %s50 = sphi 0, %s52
      %s53 = sphi 0, %s50
      %s54 = sphi 0, %s53
      %s70 = sphi 0, %s54
      %s76 = sphi 0, %s78
      %s79 = sphi 0, %s76
      %s80 = sphi 0, %s79
      %s96 = sphi 0, %s80
      %s102 = sphi 0, %s104
      %s105 = sphi 0, %s102
      %s106 = sphi 0, %s105
      %s122 = sphi 0, %s106
      %s126 = sphi 0, %s126
      %s128 = sphi 0, %s126
      %s129 = sphi 0, %s128
      %s143 = sphi 0, %s129
      %s149 = sphi 0, %s151
      %s152 = sphi 0, %s149
      %s153 = sphi 0, %s152
      %s169 = sphi 0, %s153
    $region4: #{attention_layer_forward.1} parent=1 // loop_header_branch
      %17 = sbr.rel (%p15) target = $region8
    $region5: #{attention_layer_forward.1} parent=1 // loop_body
      %s19 = ssub.s32 %s14, 1
      %s20 = ssub.s32 %s14, 2
      %s21 = sadd.s32 %s14, 1
      %s22 = ssub.s32 %s14, %s21
      %p23 = scmp.eq.s32.totalorder %s22, 0
      %s25 = sadd.s32 %s24, 1
      %s26 = scalar_select %p23, %s24, %s25
      %p29 = pneg %p23
      %p30 = scmp.eq.s32.totalorder %s14, 1
      %p31 = por %p29, %p30
      %p32 = scmp.ne.s32.totalorder %s24, %s27
      %p33 = scmp.eq.s32.totalorder %s14, 0
      %p34 = por %p32, %p33
      %p35 = scmp.ne.s32.totalorder %s24, %s27
      %p36 = scmp.eq.s32.totalorder %s19, 1
      %p37 = por %p35, %p36
      %p38 = scmp.ne.s32.totalorder %s27, %s28
      %p39 = scmp.eq.s32.totalorder %s19, 0
      %p40 = por %p38, %p39
      %p41 = scmp.ne.s32.totalorder %s27, %s28
      %p42 = scmp.eq.s32.totalorder %s20, 1
      %p43 = por %p41, %p42
      %p45 = scmp.ne.s32.totalorder %s28, %s44
      %p46 = scmp.eq.s32.totalorder %s20, 0
      %p47 = por %p45, %p46
      %s48 = ssub.s32 %s14, %s21
      %p49 = scmp.eq.s32.totalorder %s48, 0
      %s51 = sadd.s32 %s50, 1
      %s52 = scalar_select %p49, %s50, %s51
      %p55 = pneg %p49
      %p56 = scmp.eq.s32.totalorder %s14, 1
      %p57 = por %p55, %p56
      %p58 = scmp.ne.s32.totalorder %s50, %s53
      %p59 = scmp.eq.s32.totalorder %s14, 0
      %p60 = por %p58, %p59
      %p61 = scmp.ne.s32.totalorder %s50, %s53
      %p62 = scmp.eq.s32.totalorder %s19, 1
      %p63 = por %p61, %p62
      %p64 = scmp.ne.s32.totalorder %s53, %s54
      %p65 = scmp.eq.s32.totalorder %s19, 0
      %p66 = por %p64, %p65
      %p67 = scmp.ne.s32.totalorder %s53, %s54
      %p68 = scmp.eq.s32.totalorder %s20, 1
      %p69 = por %p67, %p68
      %p71 = scmp.ne.s32.totalorder %s54, %s70
      %p72 = scmp.eq.s32.totalorder %s20, 0
      %p73 = por %p71, %p72
      %s74 = ssub.s32 %s14, %s21
      %p75 = scmp.eq.s32.totalorder %s74, 0
      %s77 = sadd.s32 %s76, 1
      %s78 = scalar_select %p75, %s76, %s77
      %p81 = pneg %p75
      %p82 = scmp.eq.s32.totalorder %s14, 1
      %p83 = por %p81, %p82
      %p84 = scmp.ne.s32.totalorder %s76, %s79
      %p85 = scmp.eq.s32.totalorder %s14, 0
      %p86 = por %p84, %p85
      %p87 = scmp.ne.s32.totalorder %s76, %s79
      %p88 = scmp.eq.s32.totalorder %s19, 1
      %p89 = por %p87, %p88
      %p90 = scmp.ne.s32.totalorder %s79, %s80
      %p91 = scmp.eq.s32.totalorder %s19, 0
      %p92 = por %p90, %p91
      %p93 = scmp.ne.s32.totalorder %s79, %s80
      %p94 = scmp.eq.s32.totalorder %s20, 1
      %p95 = por %p93, %p94
      %p97 = scmp.ne.s32.totalorder %s80, %s96
      %p98 = scmp.eq.s32.totalorder %s20, 0
      %p99 = por %p97, %p98
      %s100 = ssub.s32 %s14, %s21
      %p101 = scmp.eq.s32.totalorder %s100, 0
      %s103 = sadd.s32 %s102, 1
      %s104 = scalar_select %p101, %s102, %s103
      %p107 = pneg %p101
      %p108 = scmp.eq.s32.totalorder %s14, 1
      %p109 = por %p107, %p108
      %p110 = scmp.ne.s32.totalorder %s102, %s105
      %p111 = scmp.eq.s32.totalorder %s14, 0
      %p112 = por %p110, %p111
      %p113 = scmp.ne.s32.totalorder %s102, %s105
      %p114 = scmp.eq.s32.totalorder %s19, 1
      %p115 = por %p113, %p114
      %p116 = scmp.ne.s32.totalorder %s105, %s106
      %p117 = scmp.eq.s32.totalorder %s19, 0
      %p118 = por %p116, %p117
      %p119 = scmp.ne.s32.totalorder %s105, %s106
      %p120 = scmp.eq.s32.totalorder %s20, 1
      %p121 = por %p119, %p120
      %p123 = scmp.ne.s32.totalorder %s106, %s122
      %p124 = scmp.eq.s32.totalorder %s20, 0
      %p125 = por %p123, %p124
      %s127 = sadd.s32 %s126, 1
      %p130 = scmp.eq.s32.totalorder %s14, 1
      %p131 = scmp.ne.s32.totalorder %s126, %s128
      %p132 = scmp.eq.s32.totalorder %s14, 0
      %p133 = por %p131, %p132
      %p134 = scmp.ne.s32.totalorder %s126, %s128
      %p135 = scmp.eq.s32.totalorder %s19, 1
      %p136 = por %p134, %p135
      %p137 = scmp.ne.s32.totalorder %s128, %s129
      %p138 = scmp.eq.s32.totalorder %s19, 0
      %p139 = por %p137, %p138
      %p140 = scmp.ne.s32.totalorder %s128, %s129
      %p141 = scmp.eq.s32.totalorder %s20, 1
      %p142 = por %p140, %p141
      %p144 = scmp.ne.s32.totalorder %s129, %s143
      %p145 = scmp.eq.s32.totalorder %s20, 0
      %p146 = por %p144, %p145
      %s147 = ssub.s32 %s14, %s21
      %p148 = scmp.eq.s32.totalorder %s147, 0
      %s150 = sadd.s32 %s149, 1
      %s151 = scalar_select %p148, %s149, %s150
      %p154 = pneg %p148
      %p155 = scmp.eq.s32.totalorder %s14, 1
      %p156 = por %p154, %p155
      %p157 = scmp.ne.s32.totalorder %s149, %s152
      %p158 = scmp.eq.s32.totalorder %s14, 0
      %p159 = por %p157, %p158
      %p160 = scmp.ne.s32.totalorder %s149, %s152
      %p161 = scmp.eq.s32.totalorder %s19, 1
      %p162 = por %p160, %p161
      %p163 = scmp.ne.s32.totalorder %s152, %s153
      %p164 = scmp.eq.s32.totalorder %s19, 0
      %p165 = por %p163, %p164
      %p166 = scmp.ne.s32.totalorder %s152, %s153
      %p167 = scmp.eq.s32.totalorder %s20, 1
      %p168 = por %p166, %p167
      %p170 = scmp.ne.s32.totalorder %s153, %s169
      %p171 = scmp.eq.s32.totalorder %s20, 0
      %p172 = por %p170, %p171
      %p173 = scmp.le.s32.totalorder 1, %s14
      %p174 = scmp.lt.s32.totalorder %s14, 3
      %p175 = pnand %p173, %p174
      %p176 = pneg %p175
      // Predicated region
      $region9: #{attention_layer_forward.1} parent=5 // pred_check
        _
      $region10: #{attention_layer_forward.1} parent=5 // pred_check_branch
        %178 = sbr.rel (%p175) target = $region12
      $region11: #{attention_layer_forward.1} parent=5 // pred_region
        %s179 = ssub.s32 %s14, 1
        // Predicated region
        $region13: #{attention_layer_forward.1} parent=11 // pred_check
          %p180 = pneg %p139
        $region14: #{attention_layer_forward.1} parent=11 // pred_check_branch
          %182 = sbr.rel (%p180) target = $region16
        $region15: #{attention_layer_forward.1} parent=11 // pred_region
          _
        $region16: #{attention_layer_forward.1} parent=11 // pred_fallthru
          _
      $region12: #{attention_layer_forward.1} parent=5 // pred_fallthru
        _
      %p183 = scmp.lt.s32.totalorder %s14, 2
      // Predicated region
      $region17: #{attention_layer_forward.1} parent=5 // pred_check
        %p184 = pneg %p183
      $region18: #{attention_layer_forward.1} parent=5 // pred_check_branch
        %186 = sbr.rel (%p184) target = $region20
      $region19: #{attention_layer_forward.1} parent=5 // pred_region
        // Predicated region
        $region21: #{attention_layer_forward.1} parent=19 // pred_check
          %p187 = pneg %p34
        $region22: #{attention_layer_forward.1} parent=19 // pred_check_branch
          %189 = sbr.rel (%p187) target = $region24
        $region23: #{attention_layer_forward.1} parent=19 // pred_region
          %p190 = scmp.lt.s32.totalorder %s14, 1
          %s191 = scalar_select %p190, %s14, 1
          %s192 = smul.addr %s191, 2
          %s193 = smul.addr %s192, 8
          %s194 = scalar_lea.vmem %s0, %s193
        $region24: #{attention_layer_forward.1} parent=19 // pred_fallthru
          _
        // Predicated region
        $region25: #{attention_layer_forward.1} parent=19 // pred_check
          %p195 = pneg %p60
        $region26: #{attention_layer_forward.1} parent=19 // pred_check_branch
          %197 = sbr.rel (%p195) target = $region28
        $region27: #{attention_layer_forward.1} parent=19 // pred_region
          %p198 = scmp.lt.s32.totalorder %s14, 1
          %s199 = scalar_select %p198, %s14, 1
          %s200 = smul.addr %s199, 2
          %s201 = smul.addr %s200, 8
          %s202 = scalar_lea.vmem %s1, %s201
        $region28: #{attention_layer_forward.1} parent=19 // pred_fallthru
          _
        // Predicated region
        $region29: #{attention_layer_forward.1} parent=19 // pred_check
          %p203 = pneg %p86
        $region30: #{attention_layer_forward.1} parent=19 // pred_check_branch
          %205 = sbr.rel (%p203) target = $region32
        $region31: #{attention_layer_forward.1} parent=19 // pred_region
          %p206 = scmp.lt.s32.totalorder %s14, 1
          %s207 = scalar_select %p206, %s14, 1
          %s208 = smul.addr %s207, 6
          %s209 = scalar_lea.vmem %s2, %s208
        $region32: #{attention_layer_forward.1} parent=19 // pred_fallthru
          _
        // Predicated region
        $region33: #{attention_layer_forward.1} parent=19 // pred_check
          %p210 = pneg %p112
        $region34: #{attention_layer_forward.1} parent=19 // pred_check_branch
          %212 = sbr.rel (%p210) target = $region36
        $region35: #{attention_layer_forward.1} parent=19 // pred_region
          %p213 = scmp.lt.s32.totalorder %s14, 1
          %s214 = scalar_select %p213, %s14, 1
          %s215 = smul.addr %s214, 2
          %s216 = smul.addr %s215, 8
          %s217 = scalar_lea.vmem %s3, %s216
        $region36: #{attention_layer_forward.1} parent=19 // pred_fallthru
          _
      $region20: #{attention_layer_forward.1} parent=5 // pred_fallthru
        _
      %p218 = scmp.le.s32.totalorder 1, %s14
      %p219 = scmp.lt.s32.totalorder %s14, 3
      %p220 = pnand %p218, %p219
      %p221 = pneg %p220
      // Predicated region
      $region37: #{attention_layer_forward.1} parent=5 // pred_check
        _
      $region38: #{attention_layer_forward.1} parent=5 // pred_check_branch
        %223 = sbr.rel (%p220) target = $region40
      $region39: #{attention_layer_forward.1} parent=5 // pred_region
        %s224 = ssub.s32 %s14, 1
        %p225 = scmp.lt.s32.totalorder %s19, 1
        %s226 = scalar_select %p225, %s19, 1
        %s227 = smul.addr %s226, 2
        %s228 = smul.addr %s227, 8
        %s229 = scalar_lea.vmem %s0, %s228
        %p230 = pneg %p40
        %p231 = pneg %p37
        %p232 = scmp.lt.s32.totalorder %s19, 1
        %s233 = scalar_select %p232, %s19, 1
        %s234 = smul.addr %s233, 2
        %s235 = smul.addr %s234, 8
        %s236 = scalar_lea.vmem %s1, %s235
        %p237 = pneg %p66
        %p238 = pneg %p63
        %p239 = scmp.lt.s32.totalorder %s19, 1
        %s240 = scalar_select %p239, %s19, 1
        %s241 = smul.addr %s240, 6
        %s242 = scalar_lea.vmem %s2, %s241
        %p243 = pneg %p92
        %p244 = pneg %p89
        %p245 = scmp.lt.s32.totalorder %s19, 1
        %s246 = scalar_select %p245, %s19, 1
        %s247 = smul.addr %s246, 2
        %s248 = smul.addr %s247, 8
        %s249 = scalar_lea.vmem %s3, %s248
        %p250 = pneg %p118
        %p251 = pneg %p115
        %p252 = pneg %p139
        %p253 = pneg %p136
        %p254 = pneg %p165
        %p255 = pneg %p162
        %s256 = sand.u32 %s152, 1
        %s257 = scalar_lea.sflag [#allocation3], %s256
        %s258 = sand.u32 %s152, 1
        %s259 = smul.addr %s258, 16
        %s260 = scalar_lea.vmem [#allocation2], %s259
        %p261 = scmp.lt.s32.totalorder %s19, 1
        %s262 = scalar_select %p261, %s19, 1
        %s263 = smul.addr %s262, 2
        %s264 = smul.addr %s263, 8
        %s265 = scalar_lea.vmem %s0, %s264
        %p266 = scmp.lt.s32.totalorder %s19, 1
        %s267 = scalar_select %p266, %s19, 1
        %s268 = smul.addr %s267, 2
        %s269 = smul.addr %s268, 8
        %s270 = scalar_lea.vmem %s1, %s269
        %p271 = scmp.lt.s32.totalorder %s19, 1
        %s272 = scalar_select %p271, %s19, 1
        %s273 = smul.addr %s272, 6
        %s274 = scalar_lea.vmem %s2, %s273
        %p275 = scmp.lt.s32.totalorder %s19, 1
        %s276 = scalar_select %p275, %s19, 1
        %s277 = smul.addr %s276, 2
        %s278 = smul.addr %s277, 8
        %s279 = scalar_lea.vmem %s3, %s278
        %v281 = vld [vmem:[%s265] sm:$0xff]
        %v282 = vld [vmem:[%s265 + $0x8] sm:$0xff]
        %v283 = vld [vmem:[%s270] sm:$0xff]
        %v284 = vld [vmem:[%s270 + $0x8] sm:$0xff]
        %v285 = vld [vmem:[%s279] sm:$0xff]
        %v286 = vld [vmem:[%s279 + $0x8] sm:$0xff]
        %v287 = vpack.c.bf16 %v282, %v281
        %v288 = vld [vmem:[%s4] sm:$0xf]
        %v289 = vld [vmem:[%s4 + $0x4] sm:$0xf]
        %v290 = vld [vmem:[%s4 + $0x8] sm:$0xf]
        %v291 = vld [vmem:[%s4 + $0xc] sm:$0xf]
        %v296 = vunpack.c.l.b16 %v288
        %v297 = vunpack.c.l.b16 %v289
        %v298 = vunpack.c.l.b16 %v290
        %v299 = vunpack.c.l.b16 %v291
        %v300 = vpack.c.b16 %v297, %v296
        %v301 = vpack.c.b16 %v299, %v298
        %vm304 = vcmask 261120
        %v306 = vsel %vm304, %v287, 0
        %308 = vmatprep.subr.bf16.mxu0 0
        %309 = vmatpush1.bf16.msra.mxu0 0
        %310 = vmatprep.subr.bf16.mxu0 0
        %311 = vmatpush1.bf16.msra.mxu0 0
        %312 = vmatprep.subr.bf16.mxu0 0
        %313 = vmatpush1.bf16.msra.mxu0 0
        %314 = vmatprep.subr.bf16.mxu0 0
        %315 = vmatpush1.bf16.msra.mxu0 0
        %316 = vmatprep.subr.bf16.mxu0 0
        %317 = vmatpush1.bf16.msra.mxu0 0
        %318 = vmatprep.subr.bf16.mxu0 0
        %319 = vmatpush1.bf16.msra.mxu0 0
        %320 = vmatprep.subr.bf16.mxu0 0
        %321 = vmatpush1.bf16.msra.mxu0 %v301
        %322 = vmatprep.subr.bf16.mxu0 0
        %323 = vmatpush1.bf16.msra.mxu0 %v300
        %324 = vmatprep.subr.bf16.mxu0 0
        %325 = vmatpush2.bf16.msra.mxu0 0
        %326 = vmatprep.subr.bf16.mxu0 0
        %327 = vmatpush2.bf16.msra.mxu0 0
        %328 = vmatprep.subr.bf16.mxu0 0
        %329 = vmatpush2.bf16.msra.mxu0 0
        %330 = vmatprep.subr.bf16.mxu0 0
        %331 = vmatpush2.bf16.msra.mxu0 0
        %332 = vmatprep.subr.bf16.mxu0 0
        %333 = vmatpush2.bf16.msra.mxu0 0
        %334 = vmatprep.subr.bf16.mxu0 0
        %335 = vmatpush2.bf16.msra.mxu0 0
        %336 = vmatprep.subr.bf16.mxu0 0
        %337 = vmatpush2.bf16.msra.mxu0 0
        %338 = vmatprep.subr.bf16.mxu0 0
        %339 = vmatpush2.bf16.msra.mxu0 0
        %340 = vmatprep.mubr.bf16.mxu0 0
        %341 = vmatmul.mubr.bf16.gmra.mxu0 %v306
        %v342 = vpop.f32.mrf.mxu0
        %v343 = vadd.f32 0.0, %v342
        %v344 = vpop.f32.mrf.mxu0
        %v345 = vpop.f32.mrf.mxu0
        %v346 = vadd.f32 0.0, %v345
        %v347 = vpop.f32.mrf.mxu0
        %348 = vdwg.mxu0
        %vm349 = vcmp.gt.s32.totalorder %v283, 0
        %vm350 = vcmp.gt.s32.totalorder %v284, 0
        %vm351 = vcmp.eq.s32.totalorder %v283, 1
        %vm352 = vcmp.eq.s32.totalorder %v284, 1
        %vm353 = vcmp.eq.s32.totalorder %v283, 2
        %vm354 = vcmp.eq.s32.totalorder %v284, 2
        %vm355 = vcmp.eq.s32.totalorder %v283, 3
        %vm356 = vcmp.eq.s32.totalorder %v284, 3
        %v357 = vld [vmem:[%s274] sm:$0x1]
        %v359 = vlaneseq
        %v360 = vshrl.u32 %v359, 7
        %v361 = vsub.s32 0, %v360
        %v362 = vrot.slane %v357, %v361
        %v364 = vmul.f32 %v343, %v362
        %v365 = vmul.f32 %v346, %v362
        %vm366 = vcmask 130048
        %v367 = vsel %vm366, %v364, 0.0
        %368 = vadd.xlane.f32.xlu0 %v367
        %v369 = vpop.xlane.xlu0 %368
        %v370 = vsel %vm366, %v365, 0.0
        %371 = vadd.xlane.f32.xlu0 %v370
        %v372 = vpop.xlane.xlu0 %371
        %373 = vrot.lane.b32.xlu0 %v362, 112
        %v374 = vpop.permute.xlu0 %373
        %v375 = vsel %vm366, %v374, 0
        %v378 = vsel %vm366, %v343, 0
        %v381 = vsel %vm366, %v346, 0
        %383 = vmatprep.subr.mxu0 0.0
        %384 = vmatpush1.xpose.msra.mxu0 0.0
        %385 = vmatprep.subr.mxu0 0.0
        %386 = vmatpush1.xpose.msra.mxu0 0.0
        %387 = vmatprep.subr.mxu0 0.0
        %388 = vmatpush1.xpose.msra.mxu0 0.0
        %389 = vmatprep.subr.mxu0 0.0
        %390 = vmatpush1.xpose.msra.mxu0 0.0
        %391 = vmatprep.subr.mxu0 0.0
        %392 = vmatpush1.xpose.msra.mxu0 0.0
        %393 = vmatprep.subr.mxu0 0.0
        %394 = vmatpush1.xpose.msra.mxu0 0.0
        %395 = vmatprep.subr.mxu0 0.0
        %396 = vmatpush1.xpose.msra.mxu0 0.0
        %397 = vmatprep.subr.mxu0 0.0
        %398 = vmatpush1.xpose.msra.mxu0 0.0
        %399 = vmatprep.subr.mxu0 0.0
        %400 = vmatpush1.xpose.msra.mxu0 0.0
        %401 = vmatprep.subr.mxu0 0.0
        %402 = vmatpush1.xpose.msra.mxu0 0.0
        %403 = vmatprep.subr.mxu0 0.0
        %404 = vmatpush1.xpose.msra.mxu0 0.0
        %405 = vmatprep.subr.mxu0 0.0
        %406 = vmatpush1.xpose.msra.mxu0 0.0
        %407 = vmatprep.subr.mxu0 0.0
        %408 = vmatpush1.xpose.msra.mxu0 0.0
        %409 = vmatprep.subr.mxu0 0.0
        %410 = vmatpush1.xpose.msra.mxu0 0.0
        %411 = vmatprep.subr.mxu0 0.0
        %412 = vmatpush1.xpose.msra.mxu0 %v381
        %413 = vmatprep.subr.mxu0 0.0
        %414 = vmatpush1.xpose.msra.mxu0 %v378
        %415 = vmatprep.subr.mxu0 0.0
        %416 = vmatpush2.xpose.msra.mxu0 0.0
        %417 = vmatprep.subr.mxu0 0.0
        %418 = vmatpush2.xpose.msra.mxu0 0.0
        %419 = vmatprep.subr.mxu0 0.0
        %420 = vmatpush2.xpose.msra.mxu0 0.0
        %421 = vmatprep.subr.mxu0 0.0
        %422 = vmatpush2.xpose.msra.mxu0 0.0
        %423 = vmatprep.subr.mxu0 0.0
        %424 = vmatpush2.xpose.msra.mxu0 0.0
        %425 = vmatprep.subr.mxu0 0.0
        %426 = vmatpush2.xpose.msra.mxu0 0.0
        %427 = vmatprep.subr.mxu0 0.0
        %428 = vmatpush2.xpose.msra.mxu0 0.0
        %429 = vmatprep.subr.mxu0 0.0
        %430 = vmatpush2.xpose.msra.mxu0 0.0
        %431 = vmatprep.subr.mxu0 0.0
        %432 = vmatpush2.xpose.msra.mxu0 0.0
        %433 = vmatprep.subr.mxu0 0.0
        %434 = vmatpush2.xpose.msra.mxu0 0.0
        %435 = vmatprep.subr.mxu0 0.0
        %436 = vmatpush2.xpose.msra.mxu0 0.0
        %437 = vmatprep.subr.mxu0 0.0
        %438 = vmatpush2.xpose.msra.mxu0 0.0
        %439 = vmatprep.subr.mxu0 0.0
        %440 = vmatpush2.xpose.msra.mxu0 0.0
        %441 = vmatprep.subr.mxu0 0.0
        %442 = vmatpush2.xpose.msra.mxu0 0.0
        %443 = vmatprep.subr.mxu0 0.0
        %444 = vmatpush2.xpose.msra.mxu0 0.0
        %445 = vmatprep.subr.mxu0 0.0
        %446 = vmatpush2.xpose.msra.mxu0 0.0
        %447 = vmatprep.mubr.f32.mxu0 0.0
        %448 = vmatmul.mubr.f32.gmra.mxu0 %v375
        %v449 = vpop.f32.mrf.mxu0
        %v450 = vadd.f32 0.0, %v449
        %v451 = vpop.f32.mrf.mxu0
        %452 = vdwg.mxu0
        %v453 = vlaneseq
        %v454 = vshrl.u32 %v453, 7
        %v455 = vsub.s32 0, %v454
        %v456 = vrot.slane %v450, %v455
        %v457 = vadd.f32 %v369, %v456
        %v458 = vadd.f32 %v372, %v456
        %vm459 = vcmp.gt.f32.partialorder %v457, 0.0
        %vm460 = vcmp.gt.f32.partialorder %v458, 0.0
        %v461 = vmul.f32 %v457, 0.2
        %v462 = vmul.f32 %v458, 0.2
        %v463 = vsel %vm459, %v457, %v461
        %v464 = vsel %vm460, %v458, %v462
        %v465 = vsel %vm351, %v463, 0.0
        %v466 = vsel %vm352, %v464, 0.0
        %v467 = vadd.f32 %v465, 0.0
        %v468 = vadd.f32 %v466, 0.0
        %s469 = scalar_lea.vmem %s274, 1
        %v470 = vld [vmem:[%s469] sm:$0x1]
        %v472 = vlaneseq
        %v473 = vshrl.u32 %v472, 7
        %v474 = vsub.s32 0, %v473
        %v475 = vrot.slane %v470, %v474
        %476 = vrot.lane.b32.xlu0 %v475, 16
        %v477 = vpop.permute.xlu0 %476
        %v479 = vmul.f32 %v343, %v477
        %v480 = vmul.f32 %v346, %v477
        %483 = vrot.lane.b32.xlu0 %v479, 112
        %v484 = vpop.permute.xlu0 %483
        %485 = vrot.lane.b32.xlu0 %v480, 112
        %v486 = vpop.permute.xlu0 %485
        %v489 = vsel %vm366, %v484, 0.0
        %490 = vadd.xlane.f32.xlu0 %v489
        %v491 = vpop.xlane.xlu0 %490
        %v492 = vsel %vm366, %v486, 0.0
        %493 = vadd.xlane.f32.xlu0 %v492
        %v494 = vpop.xlane.xlu0 %493
        %495 = vrot.lane.b32.xlu0 %v475, 112
        %v496 = vpop.permute.xlu0 %495
        %497 = vrot.lane.b32.xlu0 %v343, 112
        %v498 = vpop.permute.xlu0 %497
        %499 = vrot.lane.b32.xlu0 %v346, 112
        %v500 = vpop.permute.xlu0 %499
        %v501 = vsel %vm366, %v496, 0
        %v503 = vsel %vm366, %v498, 0
        %v505 = vsel %vm366, %v500, 0
        %507 = vmatprep.subr.mxu0 0.0
        %508 = vmatpush1.xpose.msra.mxu0 0.0
        %509 = vmatprep.subr.mxu0 0.0
        %510 = vmatpush1.xpose.msra.mxu0 0.0
        %511 = vmatprep.subr.mxu0 0.0
        %512 = vmatpush1.xpose.msra.mxu0 0.0
        %513 = vmatprep.subr.mxu0 0.0
        %514 = vmatpush1.xpose.msra.mxu0 0.0
        %515 = vmatprep.subr.mxu0 0.0
        %516 = vmatpush1.xpose.msra.mxu0 0.0
        %517 = vmatprep.subr.mxu0 0.0
        %518 = vmatpush1.xpose.msra.mxu0 0.0
        %519 = vmatprep.subr.mxu0 0.0
        %520 = vmatpush1.xpose.msra.mxu0 0.0
        %521 = vmatprep.subr.mxu0 0.0
        %522 = vmatpush1.xpose.msra.mxu0 0.0
        %523 = vmatprep.subr.mxu0 0.0
        %524 = vmatpush1.xpose.msra.mxu0 0.0
        %525 = vmatprep.subr.mxu0 0.0
        %526 = vmatpush1.xpose.msra.mxu0 0.0
        %527 = vmatprep.subr.mxu0 0.0
        %528 = vmatpush1.xpose.msra.mxu0 0.0
        %529 = vmatprep.subr.mxu0 0.0
        %530 = vmatpush1.xpose.msra.mxu0 0.0
        %531 = vmatprep.subr.mxu0 0.0
        %532 = vmatpush1.xpose.msra.mxu0 0.0
        %533 = vmatprep.subr.mxu0 0.0
        %534 = vmatpush1.xpose.msra.mxu0 0.0
        %535 = vmatprep.subr.mxu0 0.0
        %536 = vmatpush1.xpose.msra.mxu0 %v505
        %537 = vmatprep.subr.mxu0 0.0
        %538 = vmatpush1.xpose.msra.mxu0 %v503
        %539 = vmatprep.subr.mxu0 0.0
        %540 = vmatpush2.xpose.msra.mxu0 0.0
        %541 = vmatprep.subr.mxu0 0.0
        %542 = vmatpush2.xpose.msra.mxu0 0.0
        %543 = vmatprep.subr.mxu0 0.0
        %544 = vmatpush2.xpose.msra.mxu0 0.0
        %545 = vmatprep.subr.mxu0 0.0
        %546 = vmatpush2.xpose.msra.mxu0 0.0
        %547 = vmatprep.subr.mxu0 0.0
        %548 = vmatpush2.xpose.msra.mxu0 0.0
        %549 = vmatprep.subr.mxu0 0.0
        %550 = vmatpush2.xpose.msra.mxu0 0.0
        %551 = vmatprep.subr.mxu0 0.0
        %552 = vmatpush2.xpose.msra.mxu0 0.0
        %553 = vmatprep.subr.mxu0 0.0
        %554 = vmatpush2.xpose.msra.mxu0 0.0
        %555 = vmatprep.subr.mxu0 0.0
        %556 = vmatpush2.xpose.msra.mxu0 0.0
        %557 = vmatprep.subr.mxu0 0.0
        %558 = vmatpush2.xpose.msra.mxu0 0.0
        %559 = vmatprep.subr.mxu0 0.0
        %560 = vmatpush2.xpose.msra.mxu0 0.0
        %561 = vmatprep.subr.mxu0 0.0
        %562 = vmatpush2.xpose.msra.mxu0 0.0
        %563 = vmatprep.subr.mxu0 0.0
        %564 = vmatpush2.xpose.msra.mxu0 0.0
        %565 = vmatprep.subr.mxu0 0.0
        %566 = vmatpush2.xpose.msra.mxu0 0.0
        %567 = vmatprep.subr.mxu0 0.0
        %568 = vmatpush2.xpose.msra.mxu0 0.0
        %569 = vmatprep.subr.mxu0 0.0
        %570 = vmatpush2.xpose.msra.mxu0 0.0
        %571 = vmatprep.mubr.f32.mxu0 0.0
        %572 = vmatmul.mubr.f32.gmra.mxu0 %v501
        %v573 = vpop.f32.mrf.mxu0
        %v574 = vadd.f32 0.0, %v573
        %v575 = vpop.f32.mrf.mxu0
        %576 = vdwg.mxu0
        %v577 = vlaneseq
        %v578 = vshrl.u32 %v577, 7
        %v579 = vsub.s32 0, %v578
        %v580 = vrot.slane %v574, %v579
        %v581 = vadd.f32 %v491, %v580
        %v582 = vadd.f32 %v494, %v580
        %vm583 = vcmp.gt.f32.partialorder %v581, 0.0
        %vm584 = vcmp.gt.f32.partialorder %v582, 0.0
        %v585 = vmul.f32 %v581, 0.2
        %v586 = vmul.f32 %v582, 0.2
        %v587 = vsel %vm583, %v581, %v585
        %v588 = vsel %vm584, %v582, %v586
        %v589 = vsel %vm353, %v587, 0.0
        %v590 = vsel %vm354, %v588, 0.0
        %v591 = vadd.f32 %v467, %v589
        %v592 = vadd.f32 %v468, %v590
        %s593 = scalar_lea.vmem %s274, 2
        %v594 = vld [vmem:[%s593] sm:$0x1]
        %v596 = vlaneseq
        %v597 = vshrl.u32 %v596, 7
        %v598 = vsub.s32 0, %v597
        %v599 = vrot.slane %v594, %v598
        %600 = vrot.lane.b32.xlu0 %v599, 32
        %v601 = vpop.permute.xlu0 %600
        %v603 = vmul.f32 %v343, %v601
        %v604 = vmul.f32 %v346, %v601
        %607 = vrot.lane.b32.xlu0 %v603, 96
        %v608 = vpop.permute.xlu0 %607
        %609 = vrot.lane.b32.xlu0 %v604, 96
        %v610 = vpop.permute.xlu0 %609
        %v613 = vsel %vm366, %v608, 0.0
        %614 = vadd.xlane.f32.xlu0 %v613
        %v615 = vpop.xlane.xlu0 %614
        %v616 = vsel %vm366, %v610, 0.0
        %617 = vadd.xlane.f32.xlu0 %v616
        %v618 = vpop.xlane.xlu0 %617
        %619 = vrot.lane.b32.xlu0 %v599, 112
        %v620 = vpop.permute.xlu0 %619
        %621 = vrot.lane.b32.xlu0 %v343, 96
        %v622 = vpop.permute.xlu0 %621
        %623 = vrot.lane.b32.xlu0 %v346, 96
        %v624 = vpop.permute.xlu0 %623
        %v625 = vsel %vm366, %v620, 0
        %v627 = vsel %vm366, %v622, 0
        %v629 = vsel %vm366, %v624, 0
        %631 = vmatprep.subr.mxu0 0.0
        %632 = vmatpush1.xpose.msra.mxu0 0.0
        %633 = vmatprep.subr.mxu0 0.0
        %634 = vmatpush1.xpose.msra.mxu0 0.0
        %635 = vmatprep.subr.mxu0 0.0
        %636 = vmatpush1.xpose.msra.mxu0 0.0
        %637 = vmatprep.subr.mxu0 0.0
        %638 = vmatpush1.xpose.msra.mxu0 0.0
        %639 = vmatprep.subr.mxu0 0.0
        %640 = vmatpush1.xpose.msra.mxu0 0.0
        %641 = vmatprep.subr.mxu0 0.0
        %642 = vmatpush1.xpose.msra.mxu0 0.0
        %643 = vmatprep.subr.mxu0 0.0
        %644 = vmatpush1.xpose.msra.mxu0 0.0
        %645 = vmatprep.subr.mxu0 0.0
        %646 = vmatpush1.xpose.msra.mxu0 0.0
        %647 = vmatprep.subr.mxu0 0.0
        %648 = vmatpush1.xpose.msra.mxu0 0.0
        %649 = vmatprep.subr.mxu0 0.0
        %650 = vmatpush1.xpose.msra.mxu0 0.0
        %651 = vmatprep.subr.mxu0 0.0
        %652 = vmatpush1.xpose.msra.mxu0 0.0
        %653 = vmatprep.subr.mxu0 0.0
        %654 = vmatpush1.xpose.msra.mxu0 0.0
        %655 = vmatprep.subr.mxu0 0.0
        %656 = vmatpush1.xpose.msra.mxu0 0.0
        %657 = vmatprep.subr.mxu0 0.0
        %658 = vmatpush1.xpose.msra.mxu0 0.0
        %659 = vmatprep.subr.mxu0 0.0
        %660 = vmatpush1.xpose.msra.mxu0 %v629
        %661 = vmatprep.subr.mxu0 0.0
        %662 = vmatpush1.xpose.msra.mxu0 %v627
        %663 = vmatprep.subr.mxu0 0.0
        %664 = vmatpush2.xpose.msra.mxu0 0.0
        %665 = vmatprep.subr.mxu0 0.0
        %666 = vmatpush2.xpose.msra.mxu0 0.0
        %667 = vmatprep.subr.mxu0 0.0
        %668 = vmatpush2.xpose.msra.mxu0 0.0
        %669 = vmatprep.subr.mxu0 0.0
        %670 = vmatpush2.xpose.msra.mxu0 0.0
        %671 = vmatprep.subr.mxu0 0.0
        %672 = vmatpush2.xpose.msra.mxu0 0.0
        %673 = vmatprep.subr.mxu0 0.0
        %674 = vmatpush2.xpose.msra.mxu0 0.0
        %675 = vmatprep.subr.mxu0 0.0
        %676 = vmatpush2.xpose.msra.mxu0 0.0
        %677 = vmatprep.subr.mxu0 0.0
        %678 = vmatpush2.xpose.msra.mxu0 0.0
        %679 = vmatprep.subr.mxu0 0.0
        %680 = vmatpush2.xpose.msra.mxu0 0.0
        %681 = vmatprep.subr.mxu0 0.0
        %682 = vmatpush2.xpose.msra.mxu0 0.0
        %683 = vmatprep.subr.mxu0 0.0
        %684 = vmatpush2.xpose.msra.mxu0 0.0
        %685 = vmatprep.subr.mxu0 0.0
        %686 = vmatpush2.xpose.msra.mxu0 0.0
        %687 = vmatprep.subr.mxu0 0.0
        %688 = vmatpush2.xpose.msra.mxu0 0.0
        %689 = vmatprep.subr.mxu0 0.0
        %690 = vmatpush2.xpose.msra.mxu0 0.0
        %691 = vmatprep.subr.mxu0 0.0
        %692 = vmatpush2.xpose.msra.mxu0 0.0
        %693 = vmatprep.subr.mxu0 0.0
        %694 = vmatpush2.xpose.msra.mxu0 0.0
        %695 = vmatprep.mubr.f32.mxu0 0.0
        %696 = vmatmul.mubr.f32.gmra.mxu0 %v625
        %v697 = vpop.f32.mrf.mxu0
        %v698 = vadd.f32 0.0, %v697
        %v699 = vpop.f32.mrf.mxu0
        %700 = vdwg.mxu0
        %v701 = vlaneseq
        %v702 = vshrl.u32 %v701, 7
        %v703 = vsub.s32 0, %v702
        %v704 = vrot.slane %v698, %v703
        %v705 = vadd.f32 %v615, %v704
        %v706 = vadd.f32 %v618, %v704
        %vm707 = vcmp.gt.f32.partialorder %v705, 0.0
        %vm708 = vcmp.gt.f32.partialorder %v706, 0.0
        %v709 = vmul.f32 %v705, 0.2
        %v710 = vmul.f32 %v706, 0.2
        %v711 = vsel %vm707, %v705, %v709
        %v712 = vsel %vm708, %v706, %v710
        %v713 = vsel %vm355, %v711, 0.0
        %v714 = vsel %vm356, %v712, 0.0
        %v715 = vadd.f32 %v591, %v713
        %v716 = vadd.f32 %v592, %v714
        %718 = vset.pattern.permute.xlu0 0
        %719 = vperm.xlu0 %718, %v285
        %v720 = vpop.permute.xlu0 %719
        %723 = vset.pattern.permute.xlu0 0
        %724 = vperm.xlu0 %723, %v286
        %v725 = vpop.permute.xlu0 %724
        %v727 = vmul.f32 %v343, %v720
        %v728 = vmul.f32 %v346, %v725
        %v729 = vsel %vm349, %v715, -1e+30
        %v730 = vsel %vm350, %v716, -1e+30
        %v731 = vsel %vm366, %v729, -inf
        %732 = vmax.xlane.f32.xlu0 %v731
        %v733 = vpop.xlane.xlu0 %732
        %v734 = vsel %vm366, %v730, -inf
        %735 = vmax.xlane.f32.xlu0 %v734
        %v736 = vpop.xlane.xlu0 %735
        %v737 = vsub.f32 %v729, %v733
        %v738 = vsub.f32 %v730, %v736
        %v739 = vmul.f32 %v737, 1.442695
        %v740 = vpow.pop %v739
        %v741 = vmul.f32 %v738, 1.442695
        %v742 = vpow.pop %v741
        %v743 = vsel %vm366, %v740, 0.0
        %744 = vadd.xlane.f32.xlu0 %v743
        %v745 = vpop.xlane.xlu0 %744
        %v746 = vsel %vm366, %v742, 0.0
        %747 = vadd.xlane.f32.xlu0 %v746
        %v748 = vpop.xlane.xlu0 %747
        %v749 = vrcp.pop %v745
        %v750 = vrcp.pop %v748
        %v751 = vmul.f32 %v740, %v749
        %v752 = vmul.f32 %v742, %v750
        %753 = vxpose.xlu0.b32.start [1/16] %v751, 128
        %754 = vxpose.xlu0.b32.cont [2/16] %v752, 128
        %755 = vxpose.xlu0.b32.cont [3/16] 0.0, 128
        %756 = vxpose.xlu0.b32.cont [4/16] 0.0, 128
        %757 = vxpose.xlu0.b32.cont [5/16] 0.0, 128
        %758 = vxpose.xlu0.b32.cont [6/16] 0.0, 128
        %759 = vxpose.xlu0.b32.cont [7/16] 0.0, 128
        %760 = vxpose.xlu0.b32.cont [8/16] 0.0, 128
        %761 = vxpose.xlu0.b32.cont [9/16] 0.0, 128
        %762 = vxpose.xlu0.b32.cont [10/16] 0.0, 128
        %763 = vxpose.xlu0.b32.cont [11/16] 0.0, 128
        %764 = vxpose.xlu0.b32.cont [12/16] 0.0, 128
        %765 = vxpose.xlu0.b32.cont [13/16] 0.0, 128
        %766 = vxpose.xlu0.b32.cont [14/16] 0.0, 128
        %767 = vxpose.xlu0.b32.cont [15/16] 0.0, 128
        %768 = vxpose.xlu0.b32.end [16/16] 0.0, 128
        %v769 = vpop.trf.xlu0
        %v770 = vpop.trf.xlu0
        %v771 = vpop.trf.xlu0
        %v772 = vpop.trf.xlu0
        %v773 = vpop.trf.xlu0
        %v774 = vpop.trf.xlu0
        %v775 = vpop.trf.xlu0
        %v776 = vpop.trf.xlu0
        %v777 = vpop.trf.xlu0
        %v778 = vpop.trf.xlu0
        %v779 = vpop.trf.xlu0
        %v780 = vpop.trf.xlu0
        %v781 = vpop.trf.xlu0
        %v782 = vpop.trf.xlu0
        %v783 = vpop.trf.xlu0
        %v784 = vpop.trf.xlu0
        %787 = vrot.lane.b32.xlu0 %v727, 96
        %v788 = vpop.permute.xlu0 %787
        %789 = vrot.lane.b32.xlu0 %v728, 96
        %v790 = vpop.permute.xlu0 %789
        %v794 = vsel %vm366, %v769, 0
        %v797 = vsel %vm366, %v770, 0
        %799 = vmatprep.subr.mxu0 0.0
        %800 = vmatpush1.msra.mxu0 0.0
        %801 = vmatprep.subr.mxu0 0.0
        %802 = vmatpush1.msra.mxu0 0.0
        %803 = vmatprep.subr.mxu0 0.0
        %804 = vmatpush1.msra.mxu0 0.0
        %805 = vmatprep.subr.mxu0 0.0
        %806 = vmatpush1.msra.mxu0 0.0
        %807 = vmatprep.subr.mxu0 0.0
        %808 = vmatpush1.msra.mxu0 0.0
        %809 = vmatprep.subr.mxu0 0.0
        %810 = vmatpush1.msra.mxu0 0.0
        %811 = vmatprep.subr.mxu0 0.0
        %812 = vmatpush1.msra.mxu0 0.0
        %813 = vmatprep.subr.mxu0 0.0
        %814 = vmatpush1.msra.mxu0 0.0
        %815 = vmatprep.subr.mxu0 0.0
        %816 = vmatpush1.msra.mxu0 0.0
        %817 = vmatprep.subr.mxu0 0.0
        %818 = vmatpush1.msra.mxu0 0.0
        %819 = vmatprep.subr.mxu0 0.0
        %820 = vmatpush1.msra.mxu0 0.0
        %821 = vmatprep.subr.mxu0 0.0
        %822 = vmatpush1.msra.mxu0 0.0
        %823 = vmatprep.subr.mxu0 0.0
        %824 = vmatpush1.msra.mxu0 0.0
        %825 = vmatprep.subr.mxu0 0.0
        %826 = vmatpush1.msra.mxu0 0.0
        %827 = vmatprep.subr.mxu0 0.0
        %828 = vmatpush1.msra.mxu0 %v790
        %829 = vmatprep.subr.mxu0 0.0
        %830 = vmatpush1.msra.mxu0 %v788
        %831 = vmatprep.subr.mxu0 0.0
        %832 = vmatpush2.msra.mxu0 0.0
        %833 = vmatprep.subr.mxu0 0.0
        %834 = vmatpush2.msra.mxu0 0.0
        %835 = vmatprep.subr.mxu0 0.0
        %836 = vmatpush2.msra.mxu0 0.0
        %837 = vmatprep.subr.mxu0 0.0
        %838 = vmatpush2.msra.mxu0 0.0
        %839 = vmatprep.subr.mxu0 0.0
        %840 = vmatpush2.msra.mxu0 0.0
        %841 = vmatprep.subr.mxu0 0.0
        %842 = vmatpush2.msra.mxu0 0.0
        %843 = vmatprep.subr.mxu0 0.0
        %844 = vmatpush2.msra.mxu0 0.0
        %845 = vmatprep.subr.mxu0 0.0
        %846 = vmatpush2.msra.mxu0 0.0
        %847 = vmatprep.subr.mxu0 0.0
        %848 = vmatpush2.msra.mxu0 0.0
        %849 = vmatprep.subr.mxu0 0.0
        %850 = vmatpush2.msra.mxu0 0.0
        %851 = vmatprep.subr.mxu0 0.0
        %852 = vmatpush2.msra.mxu0 0.0
        %853 = vmatprep.subr.mxu0 0.0
        %854 = vmatpush2.msra.mxu0 0.0
        %855 = vmatprep.subr.mxu0 0.0
        %856 = vmatpush2.msra.mxu0 0.0
        %857 = vmatprep.subr.mxu0 0.0
        %858 = vmatpush2.msra.mxu0 0.0
        %859 = vmatprep.subr.mxu0 0.0
        %860 = vmatpush2.msra.mxu0 0.0
        %861 = vmatprep.subr.mxu0 0.0
        %862 = vmatpush2.msra.mxu0 0.0
        %863 = vmatprep.mubr.f32.mxu0 0.0
        %864 = vmatmul.mubr.f32.gmra.mxu0 %v794
        %v865 = vpop.f32.mrf.mxu0
        %v866 = vadd.f32 0.0, %v865
        %v867 = vpop.f32.mrf.mxu0
        %868 = vmatprep.mubr.f32.mxu0 0.0
        %869 = vmatmul.mubr.f32.gmra.mxu0 %v797
        %v870 = vpop.f32.mrf.mxu0
        %v871 = vadd.f32 0.0, %v870
        %v872 = vpop.f32.mrf.mxu0
        %873 = vdwg.mxu0
        %s874 = scalar_lea.vmem %s274, 3
        %v875 = vld [vmem:[%s874] sm:$0x1]
        %v877 = vlaneseq
        %v878 = vshrl.u32 %v877, 7
        %v879 = vsub.s32 0, %v878
        %v880 = vrot.slane %v875, %v879
        %881 = vrot.lane.b32.xlu0 %v880, 48
        %v882 = vpop.permute.xlu0 %881
        %v884 = vmul.f32 %v343, %v882
        %v885 = vmul.f32 %v346, %v882
        %888 = vrot.lane.b32.xlu0 %v884, 80
        %v889 = vpop.permute.xlu0 %888
        %890 = vrot.lane.b32.xlu0 %v885, 80
        %v891 = vpop.permute.xlu0 %890
        %v894 = vsel %vm366, %v889, 0.0
        %895 = vadd.xlane.f32.xlu0 %v894
        %v896 = vpop.xlane.xlu0 %895
        %v897 = vsel %vm366, %v891, 0.0
        %898 = vadd.xlane.f32.xlu0 %v897
        %v899 = vpop.xlane.xlu0 %898
        %900 = vrot.lane.b32.xlu0 %v880, 112
        %v901 = vpop.permute.xlu0 %900
        %902 = vrot.lane.b32.xlu0 %v343, 80
        %v903 = vpop.permute.xlu0 %902
        %904 = vrot.lane.b32.xlu0 %v346, 80
        %v905 = vpop.permute.xlu0 %904
        %v906 = vsel %vm366, %v901, 0
        %v908 = vsel %vm366, %v903, 0
        %v910 = vsel %vm366, %v905, 0
        %912 = vmatprep.subr.mxu0 0.0
        %913 = vmatpush1.xpose.msra.mxu0 0.0
        %914 = vmatprep.subr.mxu0 0.0
        %915 = vmatpush1.xpose.msra.mxu0 0.0
        %916 = vmatprep.subr.mxu0 0.0
        %917 = vmatpush1.xpose.msra.mxu0 0.0
        %918 = vmatprep.subr.mxu0 0.0
        %919 = vmatpush1.xpose.msra.mxu0 0.0
        %920 = vmatprep.subr.mxu0 0.0
        %921 = vmatpush1.xpose.msra.mxu0 0.0
        %922 = vmatprep.subr.mxu0 0.0
        %923 = vmatpush1.xpose.msra.mxu0 0.0
        %924 = vmatprep.subr.mxu0 0.0
        %925 = vmatpush1.xpose.msra.mxu0 0.0
        %926 = vmatprep.subr.mxu0 0.0
        %927 = vmatpush1.xpose.msra.mxu0 0.0
        %928 = vmatprep.subr.mxu0 0.0
        %929 = vmatpush1.xpose.msra.mxu0 0.0
        %930 = vmatprep.subr.mxu0 0.0
        %931 = vmatpush1.xpose.msra.mxu0 0.0
        %932 = vmatprep.subr.mxu0 0.0
        %933 = vmatpush1.xpose.msra.mxu0 0.0
        %934 = vmatprep.subr.mxu0 0.0
        %935 = vmatpush1.xpose.msra.mxu0 0.0
        %936 = vmatprep.subr.mxu0 0.0
        %937 = vmatpush1.xpose.msra.mxu0 0.0
        %938 = vmatprep.subr.mxu0 0.0
        %939 = vmatpush1.xpose.msra.mxu0 0.0
        %940 = vmatprep.subr.mxu0 0.0
        %941 = vmatpush1.xpose.msra.mxu0 %v910
        %942 = vmatprep.subr.mxu0 0.0
        %943 = vmatpush1.xpose.msra.mxu0 %v908
        %944 = vmatprep.subr.mxu0 0.0
        %945 = vmatpush2.xpose.msra.mxu0 0.0
        %946 = vmatprep.subr.mxu0 0.0
        %947 = vmatpush2.xpose.msra.mxu0 0.0
        %948 = vmatprep.subr.mxu0 0.0
        %949 = vmatpush2.xpose.msra.mxu0 0.0
        %950 = vmatprep.subr.mxu0 0.0
        %951 = vmatpush2.xpose.msra.mxu0 0.0
        %952 = vmatprep.subr.mxu0 0.0
        %953 = vmatpush2.xpose.msra.mxu0 0.0
        %954 = vmatprep.subr.mxu0 0.0
        %955 = vmatpush2.xpose.msra.mxu0 0.0
        %956 = vmatprep.subr.mxu0 0.0
        %957 = vmatpush2.xpose.msra.mxu0 0.0
        %958 = vmatprep.subr.mxu0 0.0
        %959 = vmatpush2.xpose.msra.mxu0 0.0
        %960 = vmatprep.subr.mxu0 0.0
        %961 = vmatpush2.xpose.msra.mxu0 0.0
        %962 = vmatprep.subr.mxu0 0.0
        %963 = vmatpush2.xpose.msra.mxu0 0.0
        %964 = vmatprep.subr.mxu0 0.0
        %965 = vmatpush2.xpose.msra.mxu0 0.0
        %966 = vmatprep.subr.mxu0 0.0
        %967 = vmatpush2.xpose.msra.mxu0 0.0
        %968 = vmatprep.subr.mxu0 0.0
        %969 = vmatpush2.xpose.msra.mxu0 0.0
        %970 = vmatprep.subr.mxu0 0.0
        %971 = vmatpush2.xpose.msra.mxu0 0.0
        %972 = vmatprep.subr.mxu0 0.0
        %973 = vmatpush2.xpose.msra.mxu0 0.0
        %974 = vmatprep.subr.mxu0 0.0
        %975 = vmatpush2.xpose.msra.mxu0 0.0
        %976 = vmatprep.mubr.f32.mxu0 0.0
        %977 = vmatmul.mubr.f32.gmra.mxu0 %v906
        %v978 = vpop.f32.mrf.mxu0
        %v979 = vadd.f32 0.0, %v978
        %v980 = vpop.f32.mrf.mxu0
        %981 = vdwg.mxu0
        %v982 = vlaneseq
        %v983 = vshrl.u32 %v982, 7
        %v984 = vsub.s32 0, %v983
        %v985 = vrot.slane %v979, %v984
        %v986 = vadd.f32 %v896, %v985
        %v987 = vadd.f32 %v899, %v985
        %vm988 = vcmp.gt.f32.partialorder %v986, 0.0
        %vm989 = vcmp.gt.f32.partialorder %v987, 0.0
        %v990 = vmul.f32 %v986, 0.2
        %v991 = vmul.f32 %v987, 0.2
        %v992 = vsel %vm988, %v986, %v990
        %v993 = vsel %vm989, %v987, %v991
        %v994 = vsel %vm351, %v992, 0.0
        %v995 = vsel %vm352, %v993, 0.0
        %v996 = vadd.f32 %v994, 0.0
        %v997 = vadd.f32 %v995, 0.0
        %s998 = scalar_lea.vmem %s274, 4
        %v999 = vld [vmem:[%s998] sm:$0x1]
        %v1001 = vlaneseq
        %v1002 = vshrl.u32 %v1001, 7
        %v1003 = vsub.s32 0, %v1002
        %v1004 = vrot.slane %v999, %v1003
        %1005 = vrot.lane.b32.xlu0 %v1004, 64
        %v1006 = vpop.permute.xlu0 %1005
        %v1008 = vmul.f32 %v343, %v1006
        %v1009 = vmul.f32 %v346, %v1006
        %1012 = vrot.lane.b32.xlu0 %v1008, 64
        %v1013 = vpop.permute.xlu0 %1012
        %1014 = vrot.lane.b32.xlu0 %v1009, 64
        %v1015 = vpop.permute.xlu0 %1014
        %v1018 = vsel %vm366, %v1013, 0.0
        %1019 = vadd.xlane.f32.xlu0 %v1018
        %v1020 = vpop.xlane.xlu0 %1019
        %v1021 = vsel %vm366, %v1015, 0.0
        %1022 = vadd.xlane.f32.xlu0 %v1021
        %v1023 = vpop.xlane.xlu0 %1022
        %1024 = vrot.lane.b32.xlu0 %v1004, 112
        %v1025 = vpop.permute.xlu0 %1024
        %1026 = vrot.lane.b32.xlu0 %v343, 64
        %v1027 = vpop.permute.xlu0 %1026
        %1028 = vrot.lane.b32.xlu0 %v346, 64
        %v1029 = vpop.permute.xlu0 %1028
        %v1030 = vsel %vm366, %v1025, 0
        %v1032 = vsel %vm366, %v1027, 0
        %v1034 = vsel %vm366, %v1029, 0
        %1036 = vmatprep.subr.mxu0 0.0
        %1037 = vmatpush1.xpose.msra.mxu0 0.0
        %1038 = vmatprep.subr.mxu0 0.0
        %1039 = vmatpush1.xpose.msra.mxu0 0.0
        %1040 = vmatprep.subr.mxu0 0.0
        %1041 = vmatpush1.xpose.msra.mxu0 0.0
        %1042 = vmatprep.subr.mxu0 0.0
        %1043 = vmatpush1.xpose.msra.mxu0 0.0
        %1044 = vmatprep.subr.mxu0 0.0
        %1045 = vmatpush1.xpose.msra.mxu0 0.0
        %1046 = vmatprep.subr.mxu0 0.0
        %1047 = vmatpush1.xpose.msra.mxu0 0.0
        %1048 = vmatprep.subr.mxu0 0.0
        %1049 = vmatpush1.xpose.msra.mxu0 0.0
        %1050 = vmatprep.subr.mxu0 0.0
        %1051 = vmatpush1.xpose.msra.mxu0 0.0
        %1052 = vmatprep.subr.mxu0 0.0
        %1053 = vmatpush1.xpose.msra.mxu0 0.0
        %1054 = vmatprep.subr.mxu0 0.0
        %1055 = vmatpush1.xpose.msra.mxu0 0.0
        %1056 = vmatprep.subr.mxu0 0.0
        %1057 = vmatpush1.xpose.msra.mxu0 0.0
        %1058 = vmatprep.subr.mxu0 0.0
        %1059 = vmatpush1.xpose.msra.mxu0 0.0
        %1060 = vmatprep.subr.mxu0 0.0
        %1061 = vmatpush1.xpose.msra.mxu0 0.0
        %1062 = vmatprep.subr.mxu0 0.0
        %1063 = vmatpush1.xpose.msra.mxu0 0.0
        %1064 = vmatprep.subr.mxu0 0.0
        %1065 = vmatpush1.xpose.msra.mxu0 %v1034
        %1066 = vmatprep.subr.mxu0 0.0
        %1067 = vmatpush1.xpose.msra.mxu0 %v1032
        %1068 = vmatprep.subr.mxu0 0.0
        %1069 = vmatpush2.xpose.msra.mxu0 0.0
        %1070 = vmatprep.subr.mxu0 0.0
        %1071 = vmatpush2.xpose.msra.mxu0 0.0
        %1072 = vmatprep.subr.mxu0 0.0
        %1073 = vmatpush2.xpose.msra.mxu0 0.0
        %1074 = vmatprep.subr.mxu0 0.0
        %1075 = vmatpush2.xpose.msra.mxu0 0.0
        %1076 = vmatprep.subr.mxu0 0.0
        %1077 = vmatpush2.xpose.msra.mxu0 0.0
        %1078 = vmatprep.subr.mxu0 0.0
        %1079 = vmatpush2.xpose.msra.mxu0 0.0
        %1080 = vmatprep.subr.mxu0 0.0
        %1081 = vmatpush2.xpose.msra.mxu0 0.0
        %1082 = vmatprep.subr.mxu0 0.0
        %1083 = vmatpush2.xpose.msra.mxu0 0.0
        %1084 = vmatprep.subr.mxu0 0.0
        %1085 = vmatpush2.xpose.msra.mxu0 0.0
        %1086 = vmatprep.subr.mxu0 0.0
        %1087 = vmatpush2.xpose.msra.mxu0 0.0
        %1088 = vmatprep.subr.mxu0 0.0
        %1089 = vmatpush2.xpose.msra.mxu0 0.0
        %1090 = vmatprep.subr.mxu0 0.0
        %1091 = vmatpush2.xpose.msra.mxu0 0.0
        %1092 = vmatprep.subr.mxu0 0.0
        %1093 = vmatpush2.xpose.msra.mxu0 0.0
        %1094 = vmatprep.subr.mxu0 0.0
        %1095 = vmatpush2.xpose.msra.mxu0 0.0
        %1096 = vmatprep.subr.mxu0 0.0
        %1097 = vmatpush2.xpose.msra.mxu0 0.0
        %1098 = vmatprep.subr.mxu0 0.0
        %1099 = vmatpush2.xpose.msra.mxu0 0.0
        %1100 = vmatprep.mubr.f32.mxu0 0.0
        %1101 = vmatmul.mubr.f32.gmra.mxu0 %v1030
        %v1102 = vpop.f32.mrf.mxu0
        %v1103 = vadd.f32 0.0, %v1102
        %v1104 = vpop.f32.mrf.mxu0
        %1105 = vdwg.mxu0
        %v1106 = vlaneseq
        %v1107 = vshrl.u32 %v1106, 7
        %v1108 = vsub.s32 0, %v1107
        %v1109 = vrot.slane %v1103, %v1108
        %v1110 = vadd.f32 %v1020, %v1109
        %v1111 = vadd.f32 %v1023, %v1109
        %vm1112 = vcmp.gt.f32.partialorder %v1110, 0.0
        %vm1113 = vcmp.gt.f32.partialorder %v1111, 0.0
        %v1114 = vmul.f32 %v1110, 0.2
        %v1115 = vmul.f32 %v1111, 0.2
        %v1116 = vsel %vm1112, %v1110, %v1114
        %v1117 = vsel %vm1113, %v1111, %v1115
        %v1118 = vsel %vm353, %v1116, 0.0
        %v1119 = vsel %vm354, %v1117, 0.0
        %v1120 = vadd.f32 %v996, %v1118
        %v1121 = vadd.f32 %v997, %v1119
        %s1122 = scalar_lea.vmem %s274, 5
        %v1123 = vld [vmem:[%s1122] sm:$0x1]
        %v1125 = vlaneseq
        %v1126 = vshrl.u32 %v1125, 7
        %v1127 = vsub.s32 0, %v1126
        %v1128 = vrot.slane %v1123, %v1127
        %1129 = vrot.lane.b32.xlu0 %v1128, 80
        %v1130 = vpop.permute.xlu0 %1129
        %v1132 = vmul.f32 %v343, %v1130
        %v1133 = vmul.f32 %v346, %v1130
        %1136 = vrot.lane.b32.xlu0 %v1132, 48
        %v1137 = vpop.permute.xlu0 %1136
        %1138 = vrot.lane.b32.xlu0 %v1133, 48
        %v1139 = vpop.permute.xlu0 %1138
        %v1142 = vsel %vm366, %v1137, 0.0
        %1143 = vadd.xlane.f32.xlu0 %v1142
        %v1144 = vpop.xlane.xlu0 %1143
        %v1145 = vsel %vm366, %v1139, 0.0
        %1146 = vadd.xlane.f32.xlu0 %v1145
        %v1147 = vpop.xlane.xlu0 %1146
        %1148 = vrot.lane.b32.xlu0 %v1128, 112
        %v1149 = vpop.permute.xlu0 %1148
        %1150 = vrot.lane.b32.xlu0 %v343, 48
        %v1151 = vpop.permute.xlu0 %1150
        %1152 = vrot.lane.b32.xlu0 %v346, 48
        %v1153 = vpop.permute.xlu0 %1152
        %v1154 = vsel %vm366, %v1149, 0
        %v1156 = vsel %vm366, %v1151, 0
        %v1158 = vsel %vm366, %v1153, 0
        %1160 = vmatprep.subr.mxu0 0.0
        %1161 = vmatpush1.xpose.msra.mxu0 0.0
        %1162 = vmatprep.subr.mxu0 0.0
        %1163 = vmatpush1.xpose.msra.mxu0 0.0
        %1164 = vmatprep.subr.mxu0 0.0
        %1165 = vmatpush1.xpose.msra.mxu0 0.0
        %1166 = vmatprep.subr.mxu0 0.0
        %1167 = vmatpush1.xpose.msra.mxu0 0.0
        %1168 = vmatprep.subr.mxu0 0.0
        %1169 = vmatpush1.xpose.msra.mxu0 0.0
        %1170 = vmatprep.subr.mxu0 0.0
        %1171 = vmatpush1.xpose.msra.mxu0 0.0
        %1172 = vmatprep.subr.mxu0 0.0
        %1173 = vmatpush1.xpose.msra.mxu0 0.0
        %1174 = vmatprep.subr.mxu0 0.0
        %1175 = vmatpush1.xpose.msra.mxu0 0.0
        %1176 = vmatprep.subr.mxu0 0.0
        %1177 = vmatpush1.xpose.msra.mxu0 0.0
        %1178 = vmatprep.subr.mxu0 0.0
        %1179 = vmatpush1.xpose.msra.mxu0 0.0
        %1180 = vmatprep.subr.mxu0 0.0
        %1181 = vmatpush1.xpose.msra.mxu0 0.0
        %1182 = vmatprep.subr.mxu0 0.0
        %1183 = vmatpush1.xpose.msra.mxu0 0.0
        %1184 = vmatprep.subr.mxu0 0.0
        %1185 = vmatpush1.xpose.msra.mxu0 0.0
        %1186 = vmatprep.subr.mxu0 0.0
        %1187 = vmatpush1.xpose.msra.mxu0 0.0
        %1188 = vmatprep.subr.mxu0 0.0
        %1189 = vmatpush1.xpose.msra.mxu0 %v1158
        %1190 = vmatprep.subr.mxu0 0.0
        %1191 = vmatpush1.xpose.msra.mxu0 %v1156
        %1192 = vmatprep.subr.mxu0 0.0
        %1193 = vmatpush2.xpose.msra.mxu0 0.0
        %1194 = vmatprep.subr.mxu0 0.0
        %1195 = vmatpush2.xpose.msra.mxu0 0.0
        %1196 = vmatprep.subr.mxu0 0.0
        %1197 = vmatpush2.xpose.msra.mxu0 0.0
        %1198 = vmatprep.subr.mxu0 0.0
        %1199 = vmatpush2.xpose.msra.mxu0 0.0
        %1200 = vmatprep.subr.mxu0 0.0
        %1201 = vmatpush2.xpose.msra.mxu0 0.0
        %1202 = vmatprep.subr.mxu0 0.0
        %1203 = vmatpush2.xpose.msra.mxu0 0.0
        %1204 = vmatprep.subr.mxu0 0.0
        %1205 = vmatpush2.xpose.msra.mxu0 0.0
        %1206 = vmatprep.subr.mxu0 0.0
        %1207 = vmatpush2.xpose.msra.mxu0 0.0
        %1208 = vmatprep.subr.mxu0 0.0
        %1209 = vmatpush2.xpose.msra.mxu0 0.0
        %1210 = vmatprep.subr.mxu0 0.0
        %1211 = vmatpush2.xpose.msra.mxu0 0.0
        %1212 = vmatprep.subr.mxu0 0.0
        %1213 = vmatpush2.xpose.msra.mxu0 0.0
        %1214 = vmatprep.subr.mxu0 0.0
        %1215 = vmatpush2.xpose.msra.mxu0 0.0
        %1216 = vmatprep.subr.mxu0 0.0
        %1217 = vmatpush2.xpose.msra.mxu0 0.0
        %1218 = vmatprep.subr.mxu0 0.0
        %1219 = vmatpush2.xpose.msra.mxu0 0.0
        %1220 = vmatprep.subr.mxu0 0.0
        %1221 = vmatpush2.xpose.msra.mxu0 0.0
        %1222 = vmatprep.subr.mxu0 0.0
        %1223 = vmatpush2.xpose.msra.mxu0 0.0
        %1224 = vmatprep.mubr.f32.mxu0 0.0
        %1225 = vmatmul.mubr.f32.gmra.mxu0 %v1154
        %v1226 = vpop.f32.mrf.mxu0
        %v1227 = vadd.f32 0.0, %v1226
        %v1228 = vpop.f32.mrf.mxu0
        %1229 = vdwg.mxu0
        %v1230 = vlaneseq
        %v1231 = vshrl.u32 %v1230, 7
        %v1232 = vsub.s32 0, %v1231
        %v1233 = vrot.slane %v1227, %v1232
        %v1234 = vadd.f32 %v1144, %v1233
        %v1235 = vadd.f32 %v1147, %v1233
        %vm1236 = vcmp.gt.f32.partialorder %v1234, 0.0
        %vm1237 = vcmp.gt.f32.partialorder %v1235, 0.0
        %v1238 = vmul.f32 %v1234, 0.2
        %v1239 = vmul.f32 %v1235, 0.2
        %v1240 = vsel %vm1236, %v1234, %v1238
        %v1241 = vsel %vm1237, %v1235, %v1239
        %v1242 = vsel %vm355, %v1240, 0.0
        %v1243 = vsel %vm356, %v1241, 0.0
        %v1244 = vadd.f32 %v1120, %v1242
        %v1245 = vadd.f32 %v1121, %v1243
        %v1246 = vsel %vm349, %v1244, -1e+30
        %v1247 = vsel %vm350, %v1245, -1e+30
        %v1248 = vsel %vm366, %v1246, -inf
        %1249 = vmax.xlane.f32.xlu0 %v1248
        %v1250 = vpop.xlane.xlu0 %1249
        %v1251 = vsel %vm366, %v1247, -inf
        %1252 = vmax.xlane.f32.xlu0 %v1251
        %v1253 = vpop.xlane.xlu0 %1252
        %v1254 = vsub.f32 %v1246, %v1250
        %v1255 = vsub.f32 %v1247, %v1253
        %v1256 = vmul.f32 %v1254, 1.442695
        %v1257 = vpow.pop %v1256
        %v1258 = vmul.f32 %v1255, 1.442695
        %v1259 = vpow.pop %v1258
        %v1260 = vsel %vm366, %v1257, 0.0
        %1261 = vadd.xlane.f32.xlu0 %v1260
        %v1262 = vpop.xlane.xlu0 %1261
        %v1263 = vsel %vm366, %v1259, 0.0
        %1264 = vadd.xlane.f32.xlu0 %v1263
        %v1265 = vpop.xlane.xlu0 %1264
        %v1266 = vrcp.pop %v1262
        %v1267 = vrcp.pop %v1265
        %v1268 = vmul.f32 %v1257, %v1266
        %v1269 = vmul.f32 %v1259, %v1267
        %1270 = vxpose.xlu0.b32.start [1/16] %v1268, 128
        %1271 = vxpose.xlu0.b32.cont [2/16] %v1269, 128
        %1272 = vxpose.xlu0.b32.cont [3/16] 0.0, 128
        %1273 = vxpose.xlu0.b32.cont [4/16] 0.0, 128
        %1274 = vxpose.xlu0.b32.cont [5/16] 0.0, 128
        %1275 = vxpose.xlu0.b32.cont [6/16] 0.0, 128
        %1276 = vxpose.xlu0.b32.cont [7/16] 0.0, 128
        %1277 = vxpose.xlu0.b32.cont [8/16] 0.0, 128
        %1278 = vxpose.xlu0.b32.cont [9/16] 0.0, 128
        %1279 = vxpose.xlu0.b32.cont [10/16] 0.0, 128
        %1280 = vxpose.xlu0.b32.cont [11/16] 0.0, 128
        %1281 = vxpose.xlu0.b32.cont [12/16] 0.0, 128
        %1282 = vxpose.xlu0.b32.cont [13/16] 0.0, 128
        %1283 = vxpose.xlu0.b32.cont [14/16] 0.0, 128
        %1284 = vxpose.xlu0.b32.cont [15/16] 0.0, 128
        %1285 = vxpose.xlu0.b32.end [16/16] 0.0, 128
        %v1286 = vpop.trf.xlu0
        %v1287 = vpop.trf.xlu0
        %v1288 = vpop.trf.xlu0
        %v1289 = vpop.trf.xlu0
        %v1290 = vpop.trf.xlu0
        %v1291 = vpop.trf.xlu0
        %v1292 = vpop.trf.xlu0
        %v1293 = vpop.trf.xlu0
        %v1294 = vpop.trf.xlu0
        %v1295 = vpop.trf.xlu0
        %v1296 = vpop.trf.xlu0
        %v1297 = vpop.trf.xlu0
        %v1298 = vpop.trf.xlu0
        %v1299 = vpop.trf.xlu0
        %v1300 = vpop.trf.xlu0
        %v1301 = vpop.trf.xlu0
        %1302 = vrot.lane.b32.xlu0 %v727, 48
        %v1303 = vpop.permute.xlu0 %1302
        %1304 = vrot.lane.b32.xlu0 %v728, 48
        %v1305 = vpop.permute.xlu0 %1304
        %v1309 = vsel %vm366, %v1286, 0
        %v1312 = vsel %vm366, %v1287, 0
        %1314 = vmatprep.subr.mxu0 0.0
        %1315 = vmatpush1.msra.mxu0 0.0
        %1316 = vmatprep.subr.mxu0 0.0
        %1317 = vmatpush1.msra.mxu0 0.0
        %1318 = vmatprep.subr.mxu0 0.0
        %1319 = vmatpush1.msra.mxu0 0.0
        %1320 = vmatprep.subr.mxu0 0.0
        %1321 = vmatpush1.msra.mxu0 0.0
        %1322 = vmatprep.subr.mxu0 0.0
        %1323 = vmatpush1.msra.mxu0 0.0
        %1324 = vmatprep.subr.mxu0 0.0
        %1325 = vmatpush1.msra.mxu0 0.0
        %1326 = vmatprep.subr.mxu0 0.0
        %1327 = vmatpush1.msra.mxu0 0.0
        %1328 = vmatprep.subr.mxu0 0.0
        %1329 = vmatpush1.msra.mxu0 0.0
        %1330 = vmatprep.subr.mxu0 0.0
        %1331 = vmatpush1.msra.mxu0 0.0
        %1332 = vmatprep.subr.mxu0 0.0
        %1333 = vmatpush1.msra.mxu0 0.0
        %1334 = vmatprep.subr.mxu0 0.0
        %1335 = vmatpush1.msra.mxu0 0.0
        %1336 = vmatprep.subr.mxu0 0.0
        %1337 = vmatpush1.msra.mxu0 0.0
        %1338 = vmatprep.subr.mxu0 0.0
        %1339 = vmatpush1.msra.mxu0 0.0
        %1340 = vmatprep.subr.mxu0 0.0
        %1341 = vmatpush1.msra.mxu0 0.0
        %1342 = vmatprep.subr.mxu0 0.0
        %1343 = vmatpush1.msra.mxu0 %v1305
        %1344 = vmatprep.subr.mxu0 0.0
        %1345 = vmatpush1.msra.mxu0 %v1303
        %1346 = vmatprep.subr.mxu0 0.0
        %1347 = vmatpush2.msra.mxu0 0.0
        %1348 = vmatprep.subr.mxu0 0.0
        %1349 = vmatpush2.msra.mxu0 0.0
        %1350 = vmatprep.subr.mxu0 0.0
        %1351 = vmatpush2.msra.mxu0 0.0
        %1352 = vmatprep.subr.mxu0 0.0
        %1353 = vmatpush2.msra.mxu0 0.0
        %1354 = vmatprep.subr.mxu0 0.0
        %1355 = vmatpush2.msra.mxu0 0.0
        %1356 = vmatprep.subr.mxu0 0.0
        %1357 = vmatpush2.msra.mxu0 0.0
        %1358 = vmatprep.subr.mxu0 0.0
        %1359 = vmatpush2.msra.mxu0 0.0
        %1360 = vmatprep.subr.mxu0 0.0
        %1361 = vmatpush2.msra.mxu0 0.0
        %1362 = vmatprep.subr.mxu0 0.0
        %1363 = vmatpush2.msra.mxu0 0.0
        %1364 = vmatprep.subr.mxu0 0.0
        %1365 = vmatpush2.msra.mxu0 0.0
        %1366 = vmatprep.subr.mxu0 0.0
        %1367 = vmatpush2.msra.mxu0 0.0
        %1368 = vmatprep.subr.mxu0 0.0
        %1369 = vmatpush2.msra.mxu0 0.0
        %1370 = vmatprep.subr.mxu0 0.0
        %1371 = vmatpush2.msra.mxu0 0.0
        %1372 = vmatprep.subr.mxu0 0.0
        %1373 = vmatpush2.msra.mxu0 0.0
        %1374 = vmatprep.subr.mxu0 0.0
        %1375 = vmatpush2.msra.mxu0 0.0
        %1376 = vmatprep.subr.mxu0 0.0
        %1377 = vmatpush2.msra.mxu0 0.0
        %1378 = vmatprep.mubr.f32.mxu0 0.0
        %1379 = vmatmul.mubr.f32.gmra.mxu0 %v1309
        %v1380 = vpop.f32.mrf.mxu0
        %v1381 = vadd.f32 0.0, %v1380
        %v1382 = vpop.f32.mrf.mxu0
        %1383 = vmatprep.mubr.f32.mxu0 0.0
        %1384 = vmatmul.mubr.f32.gmra.mxu0 %v1312
        %v1385 = vpop.f32.mrf.mxu0
        %v1386 = vadd.f32 0.0, %v1385
        %v1387 = vpop.f32.mrf.mxu0
        %1388 = vdwg.mxu0
        %1391 = vrot.lane.b32.xlu0 %v1381, 16
        %v1392 = vpop.permute.xlu0 %1391
        %1393 = vrot.lane.b32.xlu0 %v1386, 16
        %v1394 = vpop.permute.xlu0 %1393
        %v1397 = vsel %vm366, %v866, %v1392
        %v1398 = vsel %vm366, %v871, %v1394
        %v1399 = vmax.f32 %v1397, 0.0
        %v1400 = vmax.f32 %v1398, 0.0
        %v1401 = vadd.f32 %v1399, %v281
        %v1402 = vadd.f32 %v1400, %v282
        %1403 = vst.msk [vmem:[%s260] sm:$0xff] %vm304, %v1401
        %1404 = vst.msk [vmem:[%s260 + $0x8] sm:$0xff] %vm304, %v1402
        %s1405 = sand.u32 %s152, 1
        %s1406 = scalar_lea.sflag [#allocation3], %s1405
        %s1407 = sand.u32 %s152, 1
        %s1408 = smul.addr %s1407, 16
        %s1409 = scalar_lea.vmem [#allocation2], %s1408
        // Predicated region
        $region41: #{attention_layer_forward.1} parent=39 // pred_check
          %p1410 = pneg %p162
        $region42: #{attention_layer_forward.1} parent=39 // pred_check_branch
          %1412 = sbr.rel (%p1410) target = $region44
        $region43: #{attention_layer_forward.1} parent=39 // pred_region
          %s1414 = ssub.s32 256, 256
          %1415 = vsyncadd %s1406, %s1414
          %s1416 = smul.addr %s19, 2
          %s1417 = smul.addr %s1416, 128
          %s1418 = scalar_lea.hbm %s5, %s1417
          %s1419 = sshll.u32 %s1409, 4
          %s1420 = int_to_ptr.vmem [resolvable:$true] %s1419
          %1425 = dma.vmem_to_hbm [thread:$0]  %s1420, 256, %s1418, %s1406, 128, 128, 8
        $region44: #{attention_layer_forward.1} parent=39 // pred_fallthru
          _
      $region40: #{attention_layer_forward.1} parent=5 // pred_fallthru
        _
      %p1426 = scmp.le.s32.totalorder 2, %s14
      // Predicated region
      $region45: #{attention_layer_forward.1} parent=5 // pred_check
        %p1427 = pneg %p1426
      $region46: #{attention_layer_forward.1} parent=5 // pred_check_branch
        %1429 = sbr.rel (%p1427) target = $region48
      $region47: #{attention_layer_forward.1} parent=5 // pred_region
        %s1430 = ssub.s32 %s14, 2
        // Predicated region
        $region49: #{attention_layer_forward.1} parent=47 // pred_check
          %p1431 = pneg %p168
        $region50: #{attention_layer_forward.1} parent=47 // pred_check_branch
          %1433 = sbr.rel (%p1431) target = $region52
        $region51: #{attention_layer_forward.1} parent=47 // pred_region
          %s1434 = sand.u32 %s153, 1
          %s1435 = scalar_lea.sflag [#allocation3], %s1434
          %s1436 = sand.u32 %s153, 1
          %s1437 = smul.addr %s1436, 16
          %s1438 = scalar_lea.vmem [#allocation2], %s1437
          %1439 = dma.done %s1435, 256
        $region52: #{attention_layer_forward.1} parent=47 // pred_fallthru
          _
      $region48: #{attention_layer_forward.1} parent=5 // pred_fallthru
        _
    $region6: #{attention_layer_forward.1} parent=1 // loop_footer
      %s18 = sadd.s32 1, %s14
    $region7: #{attention_layer_forward.1} parent=1 // loop_footer_branch
      %13 = sbr.rel target = $region3
    $region8: #{attention_layer_forward.1} parent=1 // loop_exit
      _
    %1440 = vsyncpa [#allocation3], 1
    %s1441 = scalar_lea.sflag [#allocation3], 1
    %1442 = vsyncpa %s1441, 1

</llo_original>
